<compile_context>
chip_gen: v7x
topology: tpu7x:2x2x1
jax: 0.10.0
libtpu: 0.0.40
codegen_flags: <defaults>
</compile_context>

<pallas_src>
import jax
import jax.numpy as jnp
from jax import lax
from jax.experimental import pallas as pl
from jax.experimental.pallas import tpu as pltpu

KER = 3                 # opt.ker_size
LRELU_SLOPE = 0.2
BN_EPS = 1e-5

# Fixed problem geometry for this script (default SinGAN generator config).
N_IM = 2                # batch
NC_IM = 3               # image channels (opt.nc_im)
HW = 16                 # input spatial size (square)
NFC = 16                # channels of every head/body block (nfc = min_nfc)
NUM_LAYER = 5           # head + 3 body + tail
HWHW = HW * HW          # 256 columns per image
M = N_IM * HWHW         # 512 flattened (n, h, w) columns = lane axis
HOUT = HW - NUM_LAYER * (KER - 1)     # 6: valid spatial extent of the output
IND = (HW - HOUT) // 2                # 5: same centre crop as the PyTorch code
SKIP_OFF = IND * HW + IND             # 85: lane shift of the cropped skip
_H_SHIFT = HW.bit_length() - 1        # log2(HW) = 4

# ----- static geometry checks (the roll-wrap safety argument, made loud) -----
assert HW & (HW - 1) == 0, "HW must be a power of two (bit-mask h/w extraction)"
_MAX_TAP = (KER - 1) * (HW + 1)       # 34: largest conv tap lane offset
_HO1 = HW - (KER - 1)                 # widest valid extent any conv output has
# widest valid output column + largest tap offset must not wrap the lane axis
assert (N_IM - 1) * HWHW + (_HO1 - 1) * HW + (_HO1 - 1) + _MAX_TAP < M
# ... and must not cross a batch-image boundary inside the flattened columns
assert (_HO1 - 1) * HW + (_HO1 - 1) + _MAX_TAP < HWHW
# cropped-skip shift must not wrap inside the valid HOUT x HOUT output region
assert (HOUT - 1) * HW + (HOUT - 1) + SKIP_OFF < HWHW


# ----------------------------- fused kernel ---------------------------------

def _im2col(a):
    """a: (NFC, M) f32 channel-major activation -> (9*NFC, M) bf16 operand.

    Row (kh*3 + kw)*NFC + c holds a[c, m + kh*HW + kw]; the lane-roll wrap only
    lands in columns that are provably outside every valid output region (see
    the static asserts above).  Rolls are done in f32 (known-good lowering) and
    each tap is cast to bf16 before the concat, so the big stacked operand only
    ever exists in bf16.
    """
    pieces = []
    for kh in range(KER):
        for kw in range(KER):
            off = kh * HW + kw
            p = a if off == 0 else pltpu.roll(a, shift=M - off, axis=1)
            pieces.append(p.astype(jnp.bfloat16))
    return jnp.concatenate(pieces, axis=0)            # (9*NFC, M) bf16


def _bn_lrelu(y, gamma, beta, ho, ii, jj):
    """Training-mode BatchNorm (single-pass stats over the valid ho x ho cols,
    biased variance, eps=1e-5) folded to scale/shift, then LeakyReLU(0.2)."""
    mask = jnp.logical_and(ii < ho, jj < ho).astype(jnp.float32)       # (1, M)
    ym = y * mask
    stk = jnp.concatenate([ym, ym * ym], axis=0)                       # (2*NFC, M)
    s = jnp.sum(stk, axis=1, keepdims=True) * jnp.float32(1.0 / (N_IM * ho * ho))
    mean = s[:NFC, :]
    var = s[NFC:, :] - mean * mean                                     # E[x^2]-E[x]^2
    scale = gamma * lax.rsqrt(var + BN_EPS)
    shift = beta - mean * scale
    z = y * scale + shift
    return jnp.where(z >= 0, z, LRELU_SLOPE * z)


def _generator_kernel(x_ref, y_ref, w_ref, bn_ref, bt_ref, o_ref):
    # (h, w) coordinate of every flattened column m = n*HW*HW + h*HW + w.
    col = lax.broadcasted_iota(jnp.int32, (1, M), 1)
    jj = jnp.bitwise_and(col, HW - 1)                                  # w
    ii = jnp.bitwise_and(jnp.right_shift(col, _H_SHIFT), HW - 1)       # h

    # NCHW (passed as its free (N*C, H*W) reshape) -> channel-major (NFC, M);
    # head channels zero-padded 3 -> 16 so every layer shares one weight stack.
    x = x_ref[...]                                                     # (6, 256)
    a = jnp.concatenate([x[n * NC_IM:(n + 1) * NC_IM, :] for n in range(N_IM)],
                        axis=1)                                        # (3, 512)
    a = jnp.concatenate([a, jnp.zeros((NFC - NC_IM, M), jnp.float32)], axis=0)

    # head + 3 body blocks: conv -> BatchNorm(batch stats) -> LeakyReLU(0.2);
    # last iteration is the tail conv (no BN).  Conv biases of the BN blocks
    # are omitted: they cancel exactly against the batch-mean subtraction.
    ho = HW
    t = a
    for l in range(NUM_LAYER):
        t = jnp.dot(w_ref[l], _im2col(a), preferred_element_type=jnp.float32)
        ho -= KER - 1
        if l < NUM_LAYER - 1:
            a = _bn_lrelu(t, bn_ref[l, 0, :, :], bn_ref[l, 1, :, :], ho, ii, jj)

    # tail: +bias, tanh, cropped-skip residual add, emit (N*C, H*W) layout so
    # the wrapper only needs a free reshape + one crop slice afterwards.
    z = jnp.tanh(t[:NC_IM, :] + bt_ref[:NC_IM, :])                     # (3, 512)
    ys = pltpu.roll(y_ref[...], shift=HWHW - SKIP_OFF, axis=1)         # (6, 256)
    o_ref[...] = jnp.concatenate(
        [z[:, n * HWHW:(n + 1) * HWHW] + ys[n * NC_IM:(n + 1) * NC_IM, :]
         for n in range(N_IM)], axis=0)                                # (6, 256)


# ----------------------------- wrapper ---------------------------------------

def _full_spec(shape):
    return pl.BlockSpec(shape, lambda: (0,) * len(shape))


def _pack_w(w_oihw):
    """torch-layout (Cout, Cin, 3, 3) -> (NFC, 9*NFC), cols ordered (kh, kw, cin),
    zero-padded in both Cout and Cin so all layers share one operand shape."""
    cout, cin = w_oihw.shape[0], w_oihw.shape[1]
    w = jnp.zeros((NFC, NFC, KER, KER), jnp.float32).at[:cout, :cin].set(w_oihw)
    return jnp.transpose(w, (0, 2, 3, 1)).reshape(NFC, KER * KER * NFC)


def pack_params(params):
    """One-time packing of torch-layout parameters into kernel operands.
    Call ONCE; the outputs are reused by every generator_forward call."""
    w = jnp.stack([_pack_w(wl) for wl in params["conv_w"]]).astype(jnp.bfloat16)
    bn = jnp.stack([jnp.stack([g.reshape(NFC, 1), b.reshape(NFC, 1)])
                    for g, b in zip(params["bn_gamma"], params["bn_beta"])])
    bt = jnp.zeros((NFC, 1), jnp.float32).at[:NC_IM, 0].set(params["tail_b"])
    return {"w": w, "bn": bn, "bt": bt}   # (5,16,144) bf16, (4,2,16,1), (16,1)


@jax.jit
def generator_forward(x_nchw, y_nchw, packed):
    """GeneratorConcatSkip2CleanAdd.forward(x, y): NCHW in -> NCHW out."""
    # Row-major reshapes are free (bitcasts); all real layout work is in-kernel.
    x = x_nchw.astype(jnp.float32).reshape(N_IM * NC_IM, HWHW)
    y = y_nchw.astype(jnp.float32).reshape(N_IM * NC_IM, HWHW)
    out = pl.pallas_call(
        _generator_kernel,
        out_shape=jax.ShapeDtypeStruct((N_IM * NC_IM, HWHW), jnp.float32),
        in_specs=[_full_spec(x.shape), _full_spec(y.shape),
                  _full_spec(packed["w"].shape), _full_spec(packed["bn"].shape),
                  _full_spec(packed["bt"].shape)],
        out_specs=_full_spec((N_IM * NC_IM, HWHW)),
        cost_estimate=pl.CostEstimate(flops=12_000_000, transcendentals=2_000,
                                      bytes_accessed=45_000),
    )(x, y, packed["w"], packed["bn"], packed["bt"])
    # Only remaining post-call op: crop to the valid HOUT x HOUT region.
    return out.reshape(N_IM, NC_IM, HW, HW)[:, :, :HOUT, :HOUT]


# ----------------------------- model setup -----------------------------------

class Opt:
    nfc = 16
    min_nfc = 16
    ker_size = 3
    padd_size = 0
    num_layer = 5
    nc_im = 3
    input_type = "image"


def _layer_channels(opt):
    chans = [(opt.nc_im, opt.nfc)]                    # head
    n = opt.nfc
    for i in range(opt.num_layer - 2):                # body
        n = int(opt.nfc / 2 ** (i + 1))
        chans.append((max(2 * n, opt.min_nfc), max(n, opt.min_nfc)))
    chans.append((max(n, opt.min_nfc), opt.nc_im))    # tail
    return chans


def init_params(key, opt):
    chans = _layer_channels(opt)
    # This fused kernel is specialized to the default SinGAN configuration.
    assert opt.ker_size == KER and opt.padd_size == 0
    assert opt.num_layer == NUM_LAYER and opt.nc_im == NC_IM
    assert chans == [(NC_IM, NFC)] + [(NFC, NFC)] * 3 + [(NFC, NC_IM)]
    conv_w, bn_gamma, bn_beta = [], [], []
    for li, (cin, cout) in enumerate(chans):
        key, kw, kg, kb = jax.random.split(key, 4)
        conv_w.append(0.05 * jax.random.normal(kw, (cout, cin, KER, KER),
                                               jnp.float32))
        if li < len(chans) - 1:                       # head/body have BatchNorm
            bn_gamma.append(1.0 + 0.05 * jax.random.normal(kg, (cout,),
                                                           jnp.float32))
            bn_beta.append(0.05 * jax.random.normal(kb, (cout,), jnp.float32))
    key, kb = jax.random.split(key)
    tail_b = 0.05 * jax.random.normal(kb, (NC_IM,), jnp.float32)
    # NOTE: Conv2d biases of the head/body blocks are intentionally omitted:
    # they are immediately followed by training-mode BatchNorm, whose batch-mean
    # subtraction cancels any per-channel constant exactly.
    return {"conv_w": conv_w, "bn_gamma": bn_gamma, "bn_beta": bn_beta,
            "tail_b": tail_b}


# Pure-JAX reference (XLA ops only, all f32) used as a correctness check.
def reference_forward(x, y, params):
    a = x.astype(jnp.float32)
    dn = ("NCHW", "OIHW", "NCHW")
    for li in range(NUM_LAYER - 1):
        a = lax.conv_general_dilated(a, params["conv_w"][li], (1, 1), "VALID",
                                     dimension_numbers=dn)
        mean = jnp.mean(a, axis=(0, 2, 3), keepdims=True)
        var = jnp.mean((a - mean) ** 2, axis=(0, 2, 3), keepdims=True)
        a = (a - mean) * lax.rsqrt(var + BN_EPS)
        a = a * params["bn_gamma"][li].reshape(1, -1, 1, 1) \
            + params["bn_beta"][li].reshape(1, -1, 1, 1)
        a = jnp.where(a >= 0, a, LRELU_SLOPE * a)
    a = lax.conv_general_dilated(a, params["conv_w"][-1], (1, 1), "VALID",
                                 dimension_numbers=dn)
    a = jnp.tanh(a + params["tail_b"].reshape(1, -1, 1, 1))
    ind = (y.shape[2] - a.shape[2]) // 2
    yc = y[:, :, ind:y.shape[2] - ind, ind:y.shape[3] - ind]
    return a + yc


if __name__ == "__main__":
    opt = Opt()
    key = jax.random.PRNGKey(0)
    kp, kx, ky = jax.random.split(key, 3)

    params = init_params(kp, opt)
    packed = pack_params(params)          # one-time packing, off the hot path

    x = jax.random.normal(kx, (N_IM, NC_IM, HW, HW), jnp.float32)   # NCHW
    y = jax.random.normal(ky, (N_IM, NC_IM, HW, HW), jnp.float32)   # NCHW

    out = generator_forward(x, y, packed)
    jax.block_until_ready(out)
    # 5 pad-0 3x3 convs: 16 -> 6 spatial; output is NCHW (2, 3, 6, 6).
    assert out.shape == (N_IM, NC_IM, HOUT, HOUT), out.shape

    ref = reference_forward(x, y, params)
    # bf16 MXU operands (f32 accumulation) bound the deviation from the pure-f32
    # reference; 5e-2 absolute on O(1) outputs is a meaningful check.
    max_err = float(jnp.max(jnp.abs(out - ref)))
    assert max_err < 5e-2, f"mismatch vs reference: max |err| = {max_err}"
    print("KERNEL_OK")
</pallas_src>

<mosaic_0001>
module attributes {stable_mosaic.version = 11 : i64} {
  func.func @_generator_kernel(%arg0: memref<6x256xf32, #tpu.memory_space<vmem>>, %arg1: memref<6x256xf32, #tpu.memory_space<vmem>>, %arg2: memref<5x16x144xbf16, #tpu.memory_space<vmem>>, %arg3: memref<4x2x16x1xf32, #tpu.memory_space<vmem>>, %arg4: memref<16x1xf32, #tpu.memory_space<vmem>>, %arg5: memref<6x256xf32, #tpu.memory_space<vmem>>) attributes {dimension_semantics = [], scalar_prefetch = 0 : i64, scratch_operands = 0 : i64, tpu.core_type = #tpu.core_type<tc>} {
    %0 = tpu.iota {dimensions = array<i32: 1>} : vector<1x512xi32>
    %c15_i32 = arith.constant 15 : i32
    %1 = vector.broadcast %c15_i32 : i32 to vector<1x512xi32>
    %2 = arith.andi %0, %1 : vector<1x512xi32>
    %c4_i32 = arith.constant 4 : i32
    %3 = vector.broadcast %c4_i32 : i32 to vector<1x512xi32>
    %4 = arith.shrsi %0, %3 : vector<1x512xi32>
    %c15_i32_0 = arith.constant 15 : i32
    %5 = vector.broadcast %c15_i32_0 : i32 to vector<1x512xi32>
    %6 = arith.andi %4, %5 : vector<1x512xi32>
    %c0 = arith.constant 0 : index
    %c0_1 = arith.constant 0 : index
    %7 = vector.load %arg0[%c0, %c0_1] : memref<6x256xf32, #tpu.memory_space<vmem>>, vector<6x256xf32>
    %8 = vector.extract_strided_slice %7 {offsets = [0, 0], sizes = [3, 256], strides = [1, 1]} : vector<6x256xf32> to vector<3x256xf32>
    %9 = vector.extract_strided_slice %7 {offsets = [3, 0], sizes = [3, 256], strides = [1, 1]} : vector<6x256xf32> to vector<3x256xf32>
    %10 = tpu.concatenate %8, %9 in 1 : vector<3x256xf32>, vector<3x256xf32> -> vector<3x512xf32>
    %cst = arith.constant 0.000000e+00 : f32
    %11 = vector.broadcast %cst : f32 to vector<13x512xf32>
    %12 = tpu.concatenate %10, %11 in 0 : vector<3x512xf32>, vector<13x512xf32> -> vector<16x512xf32>
    %c0_2 = arith.constant 0 : index
    %c0_3 = arith.constant 0 : index
    %c0_4 = arith.constant 0 : index
    %13 = vector.load %arg2[%c0_2, %c0_3, %c0_4] : memref<5x16x144xbf16, #tpu.memory_space<vmem>>, vector<1x16x144xbf16>
    %14 = vector.shape_cast %13 : vector<1x16x144xbf16> to vector<16x144xbf16>
    %15 = arith.truncf %12 : vector<16x512xf32> to vector<16x512xbf16>
    %c511_i32 = arith.constant 511 : i32
    %16 = tpu.dynamic_rotate %12 by %c511_i32 dim 1 : vector<16x512xf32>, i32 -> vector<16x512xf32>
    %17 = arith.truncf %16 : vector<16x512xf32> to vector<16x512xbf16>
    %c510_i32 = arith.constant 510 : i32
    %18 = tpu.dynamic_rotate %12 by %c510_i32 dim 1 : vector<16x512xf32>, i32 -> vector<16x512xf32>
    %19 = arith.truncf %18 : vector<16x512xf32> to vector<16x512xbf16>
    %c496_i32 = arith.constant 496 : i32
    %20 = tpu.dynamic_rotate %12 by %c496_i32 dim 1 : vector<16x512xf32>, i32 -> vector<16x512xf32>
    %21 = arith.truncf %20 : vector<16x512xf32> to vector<16x512xbf16>
    %c495_i32 = arith.constant 495 : i32
    %22 = tpu.dynamic_rotate %12 by %c495_i32 dim 1 : vector<16x512xf32>, i32 -> vector<16x512xf32>
    %23 = arith.truncf %22 : vector<16x512xf32> to vector<16x512xbf16>
    %c494_i32 = arith.constant 494 : i32
    %24 = tpu.dynamic_rotate %12 by %c494_i32 dim 1 : vector<16x512xf32>, i32 -> vector<16x512xf32>
    %25 = arith.truncf %24 : vector<16x512xf32> to vector<16x512xbf16>
    %c480_i32 = arith.constant 480 : i32
    %26 = tpu.dynamic_rotate %12 by %c480_i32 dim 1 : vector<16x512xf32>, i32 -> vector<16x512xf32>
    %27 = arith.truncf %26 : vector<16x512xf32> to vector<16x512xbf16>
    %c479_i32 = arith.constant 479 : i32
    %28 = tpu.dynamic_rotate %12 by %c479_i32 dim 1 : vector<16x512xf32>, i32 -> vector<16x512xf32>
    %29 = arith.truncf %28 : vector<16x512xf32> to vector<16x512xbf16>
    %c478_i32 = arith.constant 478 : i32
    %30 = tpu.dynamic_rotate %12 by %c478_i32 dim 1 : vector<16x512xf32>, i32 -> vector<16x512xf32>
    %31 = arith.truncf %30 : vector<16x512xf32> to vector<16x512xbf16>
    %32 = tpu.concatenate %15, %17, %19, %21, %23, %25, %27, %29, %31 in 0 : vector<16x512xbf16>, vector<16x512xbf16>, vector<16x512xbf16>, vector<16x512xbf16>, vector<16x512xbf16>, vector<16x512xbf16>, vector<16x512xbf16>, vector<16x512xbf16>, vector<16x512xbf16> -> vector<144x512xbf16>
    %cst_5 = arith.constant dense<0.000000e+00> : vector<16x512xf32>
    %33 = tpu.matmul %14, %32, %cst_5 {dimension_numbers = #tpu.dot_dimension_numbers<[1], [0], [0], [1], [0, 0, 1, 1], [], []>} : vector<16x144xbf16>, vector<144x512xbf16>, vector<16x512xf32> -> vector<16x512xf32>
    %c0_6 = arith.constant 0 : index
    %c0_7 = arith.constant 0 : index
    %c0_8 = arith.constant 0 : index
    %c0_9 = arith.constant 0 : index
    %34 = vector.load %arg3[%c0_6, %c0_7, %c0_8, %c0_9] : memref<4x2x16x1xf32, #tpu.memory_space<vmem>>, vector<1x1x16x1xf32>
    %35 = vector.shape_cast %34 : vector<1x1x16x1xf32> to vector<16x1xf32>
    %c0_10 = arith.constant 0 : index
    %c1 = arith.constant 1 : index
    %c0_11 = arith.constant 0 : index
    %c0_12 = arith.constant 0 : index
    %36 = vector.load %arg3[%c0_10, %c1, %c0_11, %c0_12] : memref<4x2x16x1xf32, #tpu.memory_space<vmem>>, vector<1x1x16x1xf32>
    %37 = vector.shape_cast %36 : vector<1x1x16x1xf32> to vector<16x1xf32>
    %c14_i32 = arith.constant 14 : i32
    %38 = vector.broadcast %c14_i32 : i32 to vector<1x512xi32>
    %39 = arith.cmpi slt, %6, %38 : vector<1x512xi32>
    %c14_i32_13 = arith.constant 14 : i32
    %40 = vector.broadcast %c14_i32_13 : i32 to vector<1x512xi32>
    %41 = arith.cmpi slt, %2, %40 : vector<1x512xi32>
    %42 = arith.andi %39, %41 : vector<1x512xi1>
    %43 = arith.extui %42 : vector<1x512xi1> to vector<1x512xi32>
    %44 = arith.sitofp %43 : vector<1x512xi32> to vector<1x512xf32>
    %45 = vector.broadcast %44 : vector<1x512xf32> to vector<16x512xf32>
    %46 = arith.mulf %33, %45 : vector<16x512xf32>
    %47 = arith.mulf %46, %46 : vector<16x512xf32>
    %48 = tpu.concatenate %46, %47 in 0 : vector<16x512xf32>, vector<16x512xf32> -> vector<32x512xf32>
    %cst_14 = arith.constant dense<0.000000e+00> : vector<32xf32>
    %49 = vector.multi_reduction <add>, %48, %cst_14 [1] : vector<32x512xf32> to vector<32xf32>
    %50 = vector.shape_cast %49 : vector<32xf32> to vector<32x1xf32>
    %cst_15 = arith.constant 0.00255102036 : f32
    %51 = vector.broadcast %cst_15 : f32 to vector<32x1xf32>
    %52 = arith.mulf %50, %51 : vector<32x1xf32>
    %53 = vector.extract_strided_slice %52 {offsets = [0, 0], sizes = [16, 1], strides = [1, 1]} : vector<32x1xf32> to vector<16x1xf32>
    %54 = vector.extract_strided_slice %52 {offsets = [16, 0], sizes = [16, 1], strides = [1, 1]} : vector<32x1xf32> to vector<16x1xf32>
    %55 = arith.mulf %53, %53 : vector<16x1xf32>
    %56 = arith.subf %54, %55 : vector<16x1xf32>
    %cst_16 = arith.constant 9.99999974E-6 : f32
    %57 = vector.broadcast %cst_16 : f32 to vector<16x1xf32>
    %58 = arith.addf %56, %57 : vector<16x1xf32>
    %59 = math.rsqrt %58 : vector<16x1xf32>
    %60 = arith.mulf %35, %59 : vector<16x1xf32>
    %61 = arith.mulf %53, %60 : vector<16x1xf32>
    %62 = arith.subf %37, %61 : vector<16x1xf32>
    %63 = vector.broadcast %60 : vector<16x1xf32> to vector<16x512xf32>
    %64 = arith.mulf %33, %63 : vector<16x512xf32>
    %65 = vector.broadcast %62 : vector<16x1xf32> to vector<16x512xf32>
    %66 = arith.addf %64, %65 : vector<16x512xf32>
    %cst_17 = arith.constant 0.000000e+00 : f32
    %67 = vector.broadcast %cst_17 : f32 to vector<16x512xf32>
    %68 = arith.cmpf oge, %66, %67 : vector<16x512xf32>
    %cst_18 = arith.constant 2.000000e-01 : f32
    %69 = vector.broadcast %cst_18 : f32 to vector<16x512xf32>
    %70 = arith.mulf %69, %66 : vector<16x512xf32>
    %71 = arith.select %68, %66, %70 : vector<16x512xi1>, vector<16x512xf32>
    %c1_19 = arith.constant 1 : index
    %c0_20 = arith.constant 0 : index
    %c0_21 = arith.constant 0 : index
    %72 = vector.load %arg2[%c1_19, %c0_20, %c0_21] : memref<5x16x144xbf16, #tpu.memory_space<vmem>>, vector<1x16x144xbf16>
    %73 = vector.shape_cast %72 : vector<1x16x144xbf16> to vector<16x144xbf16>
    %74 = arith.truncf %71 : vector<16x512xf32> to vector<16x512xbf16>
    %c511_i32_22 = arith.constant 511 : i32
    %75 = tpu.dynamic_rotate %71 by %c511_i32_22 dim 1 : vector<16x512xf32>, i32 -> vector<16x512xf32>
    %76 = arith.truncf %75 : vector<16x512xf32> to vector<16x512xbf16>
    %c510_i32_23 = arith.constant 510 : i32
    %77 = tpu.dynamic_rotate %71 by %c510_i32_23 dim 1 : vector<16x512xf32>, i32 -> vector<16x512xf32>
    %78 = arith.truncf %77 : vector<16x512xf32> to vector<16x512xbf16>
    %c496_i32_24 = arith.constant 496 : i32
    %79 = tpu.dynamic_rotate %71 by %c496_i32_24 dim 1 : vector<16x512xf32>, i32 -> vector<16x512xf32>
    %80 = arith.truncf %79 : vector<16x512xf32> to vector<16x512xbf16>
    %c495_i32_25 = arith.constant 495 : i32
    %81 = tpu.dynamic_rotate %71 by %c495_i32_25 dim 1 : vector<16x512xf32>, i32 -> vector<16x512xf32>
    %82 = arith.truncf %81 : vector<16x512xf32> to vector<16x512xbf16>
    %c494_i32_26 = arith.constant 494 : i32
    %83 = tpu.dynamic_rotate %71 by %c494_i32_26 dim 1 : vector<16x512xf32>, i32 -> vector<16x512xf32>
    %84 = arith.truncf %83 : vector<16x512xf32> to vector<16x512xbf16>
    %c480_i32_27 = arith.constant 480 : i32
    %85 = tpu.dynamic_rotate %71 by %c480_i32_27 dim 1 : vector<16x512xf32>, i32 -> vector<16x512xf32>
    %86 = arith.truncf %85 : vector<16x512xf32> to vector<16x512xbf16>
    %c479_i32_28 = arith.constant 479 : i32
    %87 = tpu.dynamic_rotate %71 by %c479_i32_28 dim 1 : vector<16x512xf32>, i32 -> vector<16x512xf32>
    %88 = arith.truncf %87 : vector<16x512xf32> to vector<16x512xbf16>
    %c478_i32_29 = arith.constant 478 : i32
    %89 = tpu.dynamic_rotate %71 by %c478_i32_29 dim 1 : vector<16x512xf32>, i32 -> vector<16x512xf32>
    %90 = arith.truncf %89 : vector<16x512xf32> to vector<16x512xbf16>
    %91 = tpu.concatenate %74, %76, %78, %80, %82, %84, %86, %88, %90 in 0 : vector<16x512xbf16>, vector<16x512xbf16>, vector<16x512xbf16>, vector<16x512xbf16>, vector<16x512xbf16>, vector<16x512xbf16>, vector<16x512xbf16>, vector<16x512xbf16>, vector<16x512xbf16> -> vector<144x512xbf16>
    %cst_30 = arith.constant dense<0.000000e+00> : vector<16x512xf32>
    %92 = tpu.matmul %73, %91, %cst_30 {dimension_numbers = #tpu.dot_dimension_numbers<[1], [0], [0], [1], [0, 0, 1, 1], [], []>} : vector<16x144xbf16>, vector<144x512xbf16>, vector<16x512xf32> -> vector<16x512xf32>
    %c1_31 = arith.constant 1 : index
    %c0_32 = arith.constant 0 : index
    %c0_33 = arith.constant 0 : index
    %c0_34 = arith.constant 0 : index
    %93 = vector.load %arg3[%c1_31, %c0_32, %c0_33, %c0_34] : memref<4x2x16x1xf32, #tpu.memory_space<vmem>>, vector<1x1x16x1xf32>
    %94 = vector.shape_cast %93 : vector<1x1x16x1xf32> to vector<16x1xf32>
    %c1_35 = arith.constant 1 : index
    %c1_36 = arith.constant 1 : index
    %c0_37 = arith.constant 0 : index
    %c0_38 = arith.constant 0 : index
    %95 = vector.load %arg3[%c1_35, %c1_36, %c0_37, %c0_38] : memref<4x2x16x1xf32, #tpu.memory_space<vmem>>, vector<1x1x16x1xf32>
    %96 = vector.shape_cast %95 : vector<1x1x16x1xf32> to vector<16x1xf32>
    %c12_i32 = arith.constant 12 : i32
    %97 = vector.broadcast %c12_i32 : i32 to vector<1x512xi32>
    %98 = arith.cmpi slt, %6, %97 : vector<1x512xi32>
    %c12_i32_39 = arith.constant 12 : i32
    %99 = vector.broadcast %c12_i32_39 : i32 to vector<1x512xi32>
    %100 = arith.cmpi slt, %2, %99 : vector<1x512xi32>
    %101 = arith.andi %98, %100 : vector<1x512xi1>
    %102 = arith.extui %101 : vector<1x512xi1> to vector<1x512xi32>
    %103 = arith.sitofp %102 : vector<1x512xi32> to vector<1x512xf32>
    %104 = vector.broadcast %103 : vector<1x512xf32> to vector<16x512xf32>
    %105 = arith.mulf %92, %104 : vector<16x512xf32>
    %106 = arith.mulf %105, %105 : vector<16x512xf32>
    %107 = tpu.concatenate %105, %106 in 0 : vector<16x512xf32>, vector<16x512xf32> -> vector<32x512xf32>
    %cst_40 = arith.constant dense<0.000000e+00> : vector<32xf32>
    %108 = vector.multi_reduction <add>, %107, %cst_40 [1] : vector<32x512xf32> to vector<32xf32>
    %109 = vector.shape_cast %108 : vector<32xf32> to vector<32x1xf32>
    %cst_41 = arith.constant 0.00347222225 : f32
    %110 = vector.broadcast %cst_41 : f32 to vector<32x1xf32>
    %111 = arith.mulf %109, %110 : vector<32x1xf32>
    %112 = vector.extract_strided_slice %111 {offsets = [0, 0], sizes = [16, 1], strides = [1, 1]} : vector<32x1xf32> to vector<16x1xf32>
    %113 = vector.extract_strided_slice %111 {offsets = [16, 0], sizes = [16, 1], strides = [1, 1]} : vector<32x1xf32> to vector<16x1xf32>
    %114 = arith.mulf %112, %112 : vector<16x1xf32>
    %115 = arith.subf %113, %114 : vector<16x1xf32>
    %cst_42 = arith.constant 9.99999974E-6 : f32
    %116 = vector.broadcast %cst_42 : f32 to vector<16x1xf32>
    %117 = arith.addf %115, %116 : vector<16x1xf32>
    %118 = math.rsqrt %117 : vector<16x1xf32>
    %119 = arith.mulf %94, %118 : vector<16x1xf32>
    %120 = arith.mulf %112, %119 : vector<16x1xf32>
    %121 = arith.subf %96, %120 : vector<16x1xf32>
    %122 = vector.broadcast %119 : vector<16x1xf32> to vector<16x512xf32>
    %123 = arith.mulf %92, %122 : vector<16x512xf32>
    %124 = vector.broadcast %121 : vector<16x1xf32> to vector<16x512xf32>
    %125 = arith.addf %123, %124 : vector<16x512xf32>
    %cst_43 = arith.constant 0.000000e+00 : f32
    %126 = vector.broadcast %cst_43 : f32 to vector<16x512xf32>
    %127 = arith.cmpf oge, %125, %126 : vector<16x512xf32>
    %cst_44 = arith.constant 2.000000e-01 : f32
    %128 = vector.broadcast %cst_44 : f32 to vector<16x512xf32>
    %129 = arith.mulf %128, %125 : vector<16x512xf32>
    %130 = arith.select %127, %125, %129 : vector<16x512xi1>, vector<16x512xf32>
    %c2 = arith.constant 2 : index
    %c0_45 = arith.constant 0 : index
    %c0_46 = arith.constant 0 : index
    %131 = vector.load %arg2[%c2, %c0_45, %c0_46] : memref<5x16x144xbf16, #tpu.memory_space<vmem>>, vector<1x16x144xbf16>
    %132 = vector.shape_cast %131 : vector<1x16x144xbf16> to vector<16x144xbf16>
    %133 = arith.truncf %130 : vector<16x512xf32> to vector<16x512xbf16>
    %c511_i32_47 = arith.constant 511 : i32
    %134 = tpu.dynamic_rotate %130 by %c511_i32_47 dim 1 : vector<16x512xf32>, i32 -> vector<16x512xf32>
    %135 = arith.truncf %134 : vector<16x512xf32> to vector<16x512xbf16>
    %c510_i32_48 = arith.constant 510 : i32
    %136 = tpu.dynamic_rotate %130 by %c510_i32_48 dim 1 : vector<16x512xf32>, i32 -> vector<16x512xf32>
    %137 = arith.truncf %136 : vector<16x512xf32> to vector<16x512xbf16>
    %c496_i32_49 = arith.constant 496 : i32
    %138 = tpu.dynamic_rotate %130 by %c496_i32_49 dim 1 : vector<16x512xf32>, i32 -> vector<16x512xf32>
    %139 = arith.truncf %138 : vector<16x512xf32> to vector<16x512xbf16>
    %c495_i32_50 = arith.constant 495 : i32
    %140 = tpu.dynamic_rotate %130 by %c495_i32_50 dim 1 : vector<16x512xf32>, i32 -> vector<16x512xf32>
    %141 = arith.truncf %140 : vector<16x512xf32> to vector<16x512xbf16>
    %c494_i32_51 = arith.constant 494 : i32
    %142 = tpu.dynamic_rotate %130 by %c494_i32_51 dim 1 : vector<16x512xf32>, i32 -> vector<16x512xf32>
    %143 = arith.truncf %142 : vector<16x512xf32> to vector<16x512xbf16>
    %c480_i32_52 = arith.constant 480 : i32
    %144 = tpu.dynamic_rotate %130 by %c480_i32_52 dim 1 : vector<16x512xf32>, i32 -> vector<16x512xf32>
    %145 = arith.truncf %144 : vector<16x512xf32> to vector<16x512xbf16>
    %c479_i32_53 = arith.constant 479 : i32
    %146 = tpu.dynamic_rotate %130 by %c479_i32_53 dim 1 : vector<16x512xf32>, i32 -> vector<16x512xf32>
    %147 = arith.truncf %146 : vector<16x512xf32> to vector<16x512xbf16>
    %c478_i32_54 = arith.constant 478 : i32
    %148 = tpu.dynamic_rotate %130 by %c478_i32_54 dim 1 : vector<16x512xf32>, i32 -> vector<16x512xf32>
    %149 = arith.truncf %148 : vector<16x512xf32> to vector<16x512xbf16>
    %150 = tpu.concatenate %133, %135, %137, %139, %141, %143, %145, %147, %149 in 0 : vector<16x512xbf16>, vector<16x512xbf16>, vector<16x512xbf16>, vector<16x512xbf16>, vector<16x512xbf16>, vector<16x512xbf16>, vector<16x512xbf16>, vector<16x512xbf16>, vector<16x512xbf16> -> vector<144x512xbf16>
    %cst_55 = arith.constant dense<0.000000e+00> : vector<16x512xf32>
    %151 = tpu.matmul %132, %150, %cst_55 {dimension_numbers = #tpu.dot_dimension_numbers<[1], [0], [0], [1], [0, 0, 1, 1], [], []>} : vector<16x144xbf16>, vector<144x512xbf16>, vector<16x512xf32> -> vector<16x512xf32>
    %c2_56 = arith.constant 2 : index
    %c0_57 = arith.constant 0 : index
    %c0_58 = arith.constant 0 : index
    %c0_59 = arith.constant 0 : index
    %152 = vector.load %arg3[%c2_56, %c0_57, %c0_58, %c0_59] : memref<4x2x16x1xf32, #tpu.memory_space<vmem>>, vector<1x1x16x1xf32>
    %153 = vector.shape_cast %152 : vector<1x1x16x1xf32> to vector<16x1xf32>
    %c2_60 = arith.constant 2 : index
    %c1_61 = arith.constant 1 : index
    %c0_62 = arith.constant 0 : index
    %c0_63 = arith.constant 0 : index
    %154 = vector.load %arg3[%c2_60, %c1_61, %c0_62, %c0_63] : memref<4x2x16x1xf32, #tpu.memory_space<vmem>>, vector<1x1x16x1xf32>
    %155 = vector.shape_cast %154 : vector<1x1x16x1xf32> to vector<16x1xf32>
    %c10_i32 = arith.constant 10 : i32
    %156 = vector.broadcast %c10_i32 : i32 to vector<1x512xi32>
    %157 = arith.cmpi slt, %6, %156 : vector<1x512xi32>
    %c10_i32_64 = arith.constant 10 : i32
    %158 = vector.broadcast %c10_i32_64 : i32 to vector<1x512xi32>
    %159 = arith.cmpi slt, %2, %158 : vector<1x512xi32>
    %160 = arith.andi %157, %159 : vector<1x512xi1>
    %161 = arith.extui %160 : vector<1x512xi1> to vector<1x512xi32>
    %162 = arith.sitofp %161 : vector<1x512xi32> to vector<1x512xf32>
    %163 = vector.broadcast %162 : vector<1x512xf32> to vector<16x512xf32>
    %164 = arith.mulf %151, %163 : vector<16x512xf32>
    %165 = arith.mulf %164, %164 : vector<16x512xf32>
    %166 = tpu.concatenate %164, %165 in 0 : vector<16x512xf32>, vector<16x512xf32> -> vector<32x512xf32>
    %cst_65 = arith.constant dense<0.000000e+00> : vector<32xf32>
    %167 = vector.multi_reduction <add>, %166, %cst_65 [1] : vector<32x512xf32> to vector<32xf32>
    %168 = vector.shape_cast %167 : vector<32xf32> to vector<32x1xf32>
    %cst_66 = arith.constant 5.000000e-03 : f32
    %169 = vector.broadcast %cst_66 : f32 to vector<32x1xf32>
    %170 = arith.mulf %168, %169 : vector<32x1xf32>
    %171 = vector.extract_strided_slice %170 {offsets = [0, 0], sizes = [16, 1], strides = [1, 1]} : vector<32x1xf32> to vector<16x1xf32>
    %172 = vector.extract_strided_slice %170 {offsets = [16, 0], sizes = [16, 1], strides = [1, 1]} : vector<32x1xf32> to vector<16x1xf32>
    %173 = arith.mulf %171, %171 : vector<16x1xf32>
    %174 = arith.subf %172, %173 : vector<16x1xf32>
    %cst_67 = arith.constant 9.99999974E-6 : f32
    %175 = vector.broadcast %cst_67 : f32 to vector<16x1xf32>
    %176 = arith.addf %174, %175 : vector<16x1xf32>
    %177 = math.rsqrt %176 : vector<16x1xf32>
    %178 = arith.mulf %153, %177 : vector<16x1xf32>
    %179 = arith.mulf %171, %178 : vector<16x1xf32>
    %180 = arith.subf %155, %179 : vector<16x1xf32>
    %181 = vector.broadcast %178 : vector<16x1xf32> to vector<16x512xf32>
    %182 = arith.mulf %151, %181 : vector<16x512xf32>
    %183 = vector.broadcast %180 : vector<16x1xf32> to vector<16x512xf32>
    %184 = arith.addf %182, %183 : vector<16x512xf32>
    %cst_68 = arith.constant 0.000000e+00 : f32
    %185 = vector.broadcast %cst_68 : f32 to vector<16x512xf32>
    %186 = arith.cmpf oge, %184, %185 : vector<16x512xf32>
    %cst_69 = arith.constant 2.000000e-01 : f32
    %187 = vector.broadcast %cst_69 : f32 to vector<16x512xf32>
    %188 = arith.mulf %187, %184 : vector<16x512xf32>
    %189 = arith.select %186, %184, %188 : vector<16x512xi1>, vector<16x512xf32>
    %c3 = arith.constant 3 : index
    %c0_70 = arith.constant 0 : index
    %c0_71 = arith.constant 0 : index
    %190 = vector.load %arg2[%c3, %c0_70, %c0_71] : memref<5x16x144xbf16, #tpu.memory_space<vmem>>, vector<1x16x144xbf16>
    %191 = vector.shape_cast %190 : vector<1x16x144xbf16> to vector<16x144xbf16>
    %192 = arith.truncf %189 : vector<16x512xf32> to vector<16x512xbf16>
    %c511_i32_72 = arith.constant 511 : i32
    %193 = tpu.dynamic_rotate %189 by %c511_i32_72 dim 1 : vector<16x512xf32>, i32 -> vector<16x512xf32>
    %194 = arith.truncf %193 : vector<16x512xf32> to vector<16x512xbf16>
    %c510_i32_73 = arith.constant 510 : i32
    %195 = tpu.dynamic_rotate %189 by %c510_i32_73 dim 1 : vector<16x512xf32>, i32 -> vector<16x512xf32>
    %196 = arith.truncf %195 : vector<16x512xf32> to vector<16x512xbf16>
    %c496_i32_74 = arith.constant 496 : i32
    %197 = tpu.dynamic_rotate %189 by %c496_i32_74 dim 1 : vector<16x512xf32>, i32 -> vector<16x512xf32>
    %198 = arith.truncf %197 : vector<16x512xf32> to vector<16x512xbf16>
    %c495_i32_75 = arith.constant 495 : i32
    %199 = tpu.dynamic_rotate %189 by %c495_i32_75 dim 1 : vector<16x512xf32>, i32 -> vector<16x512xf32>
    %200 = arith.truncf %199 : vector<16x512xf32> to vector<16x512xbf16>
    %c494_i32_76 = arith.constant 494 : i32
    %201 = tpu.dynamic_rotate %189 by %c494_i32_76 dim 1 : vector<16x512xf32>, i32 -> vector<16x512xf32>
    %202 = arith.truncf %201 : vector<16x512xf32> to vector<16x512xbf16>
    %c480_i32_77 = arith.constant 480 : i32
    %203 = tpu.dynamic_rotate %189 by %c480_i32_77 dim 1 : vector<16x512xf32>, i32 -> vector<16x512xf32>
    %204 = arith.truncf %203 : vector<16x512xf32> to vector<16x512xbf16>
    %c479_i32_78 = arith.constant 479 : i32
    %205 = tpu.dynamic_rotate %189 by %c479_i32_78 dim 1 : vector<16x512xf32>, i32 -> vector<16x512xf32>
    %206 = arith.truncf %205 : vector<16x512xf32> to vector<16x512xbf16>
    %c478_i32_79 = arith.constant 478 : i32
    %207 = tpu.dynamic_rotate %189 by %c478_i32_79 dim 1 : vector<16x512xf32>, i32 -> vector<16x512xf32>
    %208 = arith.truncf %207 : vector<16x512xf32> to vector<16x512xbf16>
    %209 = tpu.concatenate %192, %194, %196, %198, %200, %202, %204, %206, %208 in 0 : vector<16x512xbf16>, vector<16x512xbf16>, vector<16x512xbf16>, vector<16x512xbf16>, vector<16x512xbf16>, vector<16x512xbf16>, vector<16x512xbf16>, vector<16x512xbf16>, vector<16x512xbf16> -> vector<144x512xbf16>
    %cst_80 = arith.constant dense<0.000000e+00> : vector<16x512xf32>
    %210 = tpu.matmul %191, %209, %cst_80 {dimension_numbers = #tpu.dot_dimension_numbers<[1], [0], [0], [1], [0, 0, 1, 1], [], []>} : vector<16x144xbf16>, vector<144x512xbf16>, vector<16x512xf32> -> vector<16x512xf32>
    %c3_81 = arith.constant 3 : index
    %c0_82 = arith.constant 0 : index
    %c0_83 = arith.constant 0 : index
    %c0_84 = arith.constant 0 : index
    %211 = vector.load %arg3[%c3_81, %c0_82, %c0_83, %c0_84] : memref<4x2x16x1xf32, #tpu.memory_space<vmem>>, vector<1x1x16x1xf32>
    %212 = vector.shape_cast %211 : vector<1x1x16x1xf32> to vector<16x1xf32>
    %c3_85 = arith.constant 3 : index
    %c1_86 = arith.constant 1 : index
    %c0_87 = arith.constant 0 : index
    %c0_88 = arith.constant 0 : index
    %213 = vector.load %arg3[%c3_85, %c1_86, %c0_87, %c0_88] : memref<4x2x16x1xf32, #tpu.memory_space<vmem>>, vector<1x1x16x1xf32>
    %214 = vector.shape_cast %213 : vector<1x1x16x1xf32> to vector<16x1xf32>
    %c8_i32 = arith.constant 8 : i32
    %215 = vector.broadcast %c8_i32 : i32 to vector<1x512xi32>
    %216 = arith.cmpi slt, %6, %215 : vector<1x512xi32>
    %c8_i32_89 = arith.constant 8 : i32
    %217 = vector.broadcast %c8_i32_89 : i32 to vector<1x512xi32>
    %218 = arith.cmpi slt, %2, %217 : vector<1x512xi32>
    %219 = arith.andi %216, %218 : vector<1x512xi1>
    %220 = arith.extui %219 : vector<1x512xi1> to vector<1x512xi32>
    %221 = arith.sitofp %220 : vector<1x512xi32> to vector<1x512xf32>
    %222 = vector.broadcast %221 : vector<1x512xf32> to vector<16x512xf32>
    %223 = arith.mulf %210, %222 : vector<16x512xf32>
    %224 = arith.mulf %223, %223 : vector<16x512xf32>
    %225 = tpu.concatenate %223, %224 in 0 : vector<16x512xf32>, vector<16x512xf32> -> vector<32x512xf32>
    %cst_90 = arith.constant dense<0.000000e+00> : vector<32xf32>
    %226 = vector.multi_reduction <add>, %225, %cst_90 [1] : vector<32x512xf32> to vector<32xf32>
    %227 = vector.shape_cast %226 : vector<32xf32> to vector<32x1xf32>
    %cst_91 = arith.constant 7.812500e-03 : f32
    %228 = vector.broadcast %cst_91 : f32 to vector<32x1xf32>
    %229 = arith.mulf %227, %228 : vector<32x1xf32>
    %230 = vector.extract_strided_slice %229 {offsets = [0, 0], sizes = [16, 1], strides = [1, 1]} : vector<32x1xf32> to vector<16x1xf32>
    %231 = vector.extract_strided_slice %229 {offsets = [16, 0], sizes = [16, 1], strides = [1, 1]} : vector<32x1xf32> to vector<16x1xf32>
    %232 = arith.mulf %230, %230 : vector<16x1xf32>
    %233 = arith.subf %231, %232 : vector<16x1xf32>
    %cst_92 = arith.constant 9.99999974E-6 : f32
    %234 = vector.broadcast %cst_92 : f32 to vector<16x1xf32>
    %235 = arith.addf %233, %234 : vector<16x1xf32>
    %236 = math.rsqrt %235 : vector<16x1xf32>
    %237 = arith.mulf %212, %236 : vector<16x1xf32>
    %238 = arith.mulf %230, %237 : vector<16x1xf32>
    %239 = arith.subf %214, %238 : vector<16x1xf32>
    %240 = vector.broadcast %237 : vector<16x1xf32> to vector<16x512xf32>
    %241 = arith.mulf %210, %240 : vector<16x512xf32>
    %242 = vector.broadcast %239 : vector<16x1xf32> to vector<16x512xf32>
    %243 = arith.addf %241, %242 : vector<16x512xf32>
    %cst_93 = arith.constant 0.000000e+00 : f32
    %244 = vector.broadcast %cst_93 : f32 to vector<16x512xf32>
    %245 = arith.cmpf oge, %243, %244 : vector<16x512xf32>
    %cst_94 = arith.constant 2.000000e-01 : f32
    %246 = vector.broadcast %cst_94 : f32 to vector<16x512xf32>
    %247 = arith.mulf %246, %243 : vector<16x512xf32>
    %248 = arith.select %245, %243, %247 : vector<16x512xi1>, vector<16x512xf32>
    %c4 = arith.constant 4 : index
    %c0_95 = arith.constant 0 : index
    %c0_96 = arith.constant 0 : index
    %249 = vector.load %arg2[%c4, %c0_95, %c0_96] : memref<5x16x144xbf16, #tpu.memory_space<vmem>>, vector<1x16x144xbf16>
    %250 = vector.shape_cast %249 : vector<1x16x144xbf16> to vector<16x144xbf16>
    %251 = arith.truncf %248 : vector<16x512xf32> to vector<16x512xbf16>
    %c511_i32_97 = arith.constant 511 : i32
    %252 = tpu.dynamic_rotate %248 by %c511_i32_97 dim 1 : vector<16x512xf32>, i32 -> vector<16x512xf32>
    %253 = arith.truncf %252 : vector<16x512xf32> to vector<16x512xbf16>
    %c510_i32_98 = arith.constant 510 : i32
    %254 = tpu.dynamic_rotate %248 by %c510_i32_98 dim 1 : vector<16x512xf32>, i32 -> vector<16x512xf32>
    %255 = arith.truncf %254 : vector<16x512xf32> to vector<16x512xbf16>
    %c496_i32_99 = arith.constant 496 : i32
    %256 = tpu.dynamic_rotate %248 by %c496_i32_99 dim 1 : vector<16x512xf32>, i32 -> vector<16x512xf32>
    %257 = arith.truncf %256 : vector<16x512xf32> to vector<16x512xbf16>
    %c495_i32_100 = arith.constant 495 : i32
    %258 = tpu.dynamic_rotate %248 by %c495_i32_100 dim 1 : vector<16x512xf32>, i32 -> vector<16x512xf32>
    %259 = arith.truncf %258 : vector<16x512xf32> to vector<16x512xbf16>
    %c494_i32_101 = arith.constant 494 : i32
    %260 = tpu.dynamic_rotate %248 by %c494_i32_101 dim 1 : vector<16x512xf32>, i32 -> vector<16x512xf32>
    %261 = arith.truncf %260 : vector<16x512xf32> to vector<16x512xbf16>
    %c480_i32_102 = arith.constant 480 : i32
    %262 = tpu.dynamic_rotate %248 by %c480_i32_102 dim 1 : vector<16x512xf32>, i32 -> vector<16x512xf32>
    %263 = arith.truncf %262 : vector<16x512xf32> to vector<16x512xbf16>
    %c479_i32_103 = arith.constant 479 : i32
    %264 = tpu.dynamic_rotate %248 by %c479_i32_103 dim 1 : vector<16x512xf32>, i32 -> vector<16x512xf32>
    %265 = arith.truncf %264 : vector<16x512xf32> to vector<16x512xbf16>
    %c478_i32_104 = arith.constant 478 : i32
    %266 = tpu.dynamic_rotate %248 by %c478_i32_104 dim 1 : vector<16x512xf32>, i32 -> vector<16x512xf32>
    %267 = arith.truncf %266 : vector<16x512xf32> to vector<16x512xbf16>
    %268 = tpu.concatenate %251, %253, %255, %257, %259, %261, %263, %265, %267 in 0 : vector<16x512xbf16>, vector<16x512xbf16>, vector<16x512xbf16>, vector<16x512xbf16>, vector<16x512xbf16>, vector<16x512xbf16>, vector<16x512xbf16>, vector<16x512xbf16>, vector<16x512xbf16> -> vector<144x512xbf16>
    %cst_105 = arith.constant dense<0.000000e+00> : vector<16x512xf32>
    %269 = tpu.matmul %250, %268, %cst_105 {dimension_numbers = #tpu.dot_dimension_numbers<[1], [0], [0], [1], [0, 0, 1, 1], [], []>} : vector<16x144xbf16>, vector<144x512xbf16>, vector<16x512xf32> -> vector<16x512xf32>
    %270 = vector.extract_strided_slice %269 {offsets = [0, 0], sizes = [3, 512], strides = [1, 1]} : vector<16x512xf32> to vector<3x512xf32>
    %c0_106 = arith.constant 0 : index
    %c0_107 = arith.constant 0 : index
    %271 = vector.load %arg4[%c0_106, %c0_107] : memref<16x1xf32, #tpu.memory_space<vmem>>, vector<3x1xf32>
    %272 = vector.broadcast %271 : vector<3x1xf32> to vector<3x512xf32>
    %273 = arith.addf %270, %272 : vector<3x512xf32>
    %274 = math.tanh %273 : vector<3x512xf32>
    %c0_108 = arith.constant 0 : index
    %c0_109 = arith.constant 0 : index
    %275 = vector.load %arg1[%c0_108, %c0_109] : memref<6x256xf32, #tpu.memory_space<vmem>>, vector<6x256xf32>
    %c171_i32 = arith.constant 171 : i32
    %276 = tpu.dynamic_rotate %275 by %c171_i32 dim 1 : vector<6x256xf32>, i32 -> vector<6x256xf32>
    %277 = vector.extract_strided_slice %274 {offsets = [0, 0], sizes = [3, 256], strides = [1, 1]} : vector<3x512xf32> to vector<3x256xf32>
    %278 = vector.extract_strided_slice %276 {offsets = [0, 0], sizes = [3, 256], strides = [1, 1]} : vector<6x256xf32> to vector<3x256xf32>
    %279 = arith.addf %277, %278 : vector<3x256xf32>
    %280 = vector.extract_strided_slice %274 {offsets = [0, 256], sizes = [3, 256], strides = [1, 1]} : vector<3x512xf32> to vector<3x256xf32>
    %281 = vector.extract_strided_slice %276 {offsets = [3, 0], sizes = [3, 256], strides = [1, 1]} : vector<6x256xf32> to vector<3x256xf32>
    %282 = arith.addf %280, %281 : vector<3x256xf32>
    %283 = tpu.concatenate %279, %282 in 0 : vector<3x256xf32>, vector<3x256xf32> -> vector<6x256xf32>
    %c0_110 = arith.constant 0 : index
    %c0_111 = arith.constant 0 : index
    %284 = vector.load %arg5[%c0_110, %c0_111] : memref<6x256xf32, #tpu.memory_space<vmem>>, vector<6x256xf32>
    tpu.vector_store %arg5[%c0_110, %c0_111], %283 {strides = array<i32>} : memref<6x256xf32, #tpu.memory_space<vmem>>, vector<6x256xf32>,
    return
  }
}

</mosaic_0001>

<llo_original>
// kernel: generator_forward.1
$region0: #{generator_forward.1}
  #allocation0 [shape = 'u32[]', space=smem, size = 0x4, offset = 0x4, fixed_abs, tag = 'smem constant byte address 0x4 - core index']
  #allocation1 [shape = 'u32[144,128]{1,0:T(1,128)}', space=vmem, size = 0x12000, scoped, tag = 'internal scratch']
  %s0 = inlined_call_operand.vmem [shape: f32[6,256], index: 0, kind: input, shape index: {}]
  %s1 = inlined_call_operand.vmem [shape: f32[6,256], index: 1, kind: input, shape index: {}]
  %s2 = inlined_call_operand.vmem [shape: bf16[5,16,144], index: 2, kind: input, shape index: {}]
  %s3 = inlined_call_operand.vmem [shape: f32[4,2,16,1], index: 3, kind: input, shape index: {}]
  %s4 = inlined_call_operand.vmem [shape: f32[16,1], index: 4, kind: input, shape index: {}]
  %s5 = inlined_call_operand.vmem [shape: f32[6,256], index: 5, kind: output, shape index: {}]
  %s6 = sld [smem:[#allocation0]]
  $region30: #{generator_forward.1} parent=0
    _
  %s8 = ssub.s32 1, %s6
  %s9 = scalar_select 0, %s8, %s6
  // Predicated region
  $region2: #{generator_forward.1} parent=0 // pred_check
    _
  $region3: #{generator_forward.1} parent=0 // pred_check_branch
    %11 = sbr.rel (0) target = $region5
  $region4: #{generator_forward.1} parent=0 // pred_region
    _
  $region5: #{generator_forward.1} parent=0 // pred_fallthru
    _
  // Predicated region
  $region6: #{generator_forward.1} parent=0 // pred_check
    _
  $region7: #{generator_forward.1} parent=0 // pred_check_branch
    %13 = sbr.rel (0) target = $region9
  $region8: #{generator_forward.1} parent=0 // pred_region
    _
  $region9: #{generator_forward.1} parent=0 // pred_fallthru
    _
  // Predicated region
  $region10: #{generator_forward.1} parent=0 // pred_check
    _
  $region11: #{generator_forward.1} parent=0 // pred_check_branch
    %15 = sbr.rel (0) target = $region13
  $region12: #{generator_forward.1} parent=0 // pred_region
    _
  $region13: #{generator_forward.1} parent=0 // pred_fallthru
    _
  // Predicated region
  $region14: #{generator_forward.1} parent=0 // pred_check
    _
  $region15: #{generator_forward.1} parent=0 // pred_check_branch
    %17 = sbr.rel (0) target = $region17
  $region16: #{generator_forward.1} parent=0 // pred_region
    _
  $region17: #{generator_forward.1} parent=0 // pred_fallthru
    _
  // Predicated region
  $region18: #{generator_forward.1} parent=0 // pred_check
    _
  $region19: #{generator_forward.1} parent=0 // pred_check_branch
    %19 = sbr.rel (0) target = $region21
  $region20: #{generator_forward.1} parent=0 // pred_region
    _
  $region21: #{generator_forward.1} parent=0 // pred_fallthru
    _
  %v21 = vlaneseq
  %v22 = vand.u32 %v21, 127
  %v23 = vadd.s32 %v22, 128
  %v24 = vadd.s32 %v22, 256
  %v25 = vadd.s32 %v22, 384
  %v26 = vand.u32 %v22, 15
  %v27 = vand.u32 %v23, 15
  %v28 = vand.u32 %v24, 15
  %v29 = vand.u32 %v25, 15
  %v30 = vshra.s32 %v22, 4
  %v31 = vshra.s32 %v23, 4
  %v32 = vshra.s32 %v24, 4
  %v33 = vshra.s32 %v25, 4
  %v34 = vand.u32 %v30, 15
  %v35 = vand.u32 %v31, 15
  %v36 = vand.u32 %v32, 15
  %v37 = vand.u32 %v33, 15
  %v38 = vld [vmem:[%s0] sm:$0x3f]
  %v39 = vld [vmem:[%s0 + $0x8] sm:$0x3f]
  %v42 = vrot.slane %v38, 3
  %v43 = vrot.slane %v39, 3
  %vm46 = vcmask 1042432
  %v47 = vsel %vm46, %v38, 0.0
  %v48 = vsel %vm46, %v39, 0.0
  %v49 = vsel %vm46, %v42, 0.0
  %v50 = vsel %vm46, %v43, 0.0
  %v51 = vld [vmem:[%s2] sm:$0xff]
  %v52 = vld [vmem:[%s2 + $0x8] sm:$0xff]
  %v53 = vpack.c.bf16 0.0, %v47
  %v54 = vpack.c.bf16 0.0, %v48
  %v55 = vpack.c.bf16 0.0, %v49
  %v56 = vpack.c.bf16 0.0, %v50
  %57 = vrot.lane.b32.xlu0 %v47, 127
  %v58 = vpop.permute.xlu0 %57
  %59 = vrot.lane.b32.xlu0 0.0, 127
  %v60 = vpop.permute.xlu0 %59
  %61 = vrot.lane.b32.xlu0 %v48, 127
  %v62 = vpop.permute.xlu0 %61
  %63 = vrot.lane.b32.xlu0 %v49, 127
  %v64 = vpop.permute.xlu0 %63
  %65 = vrot.lane.b32.xlu0 %v50, 127
  %v66 = vpop.permute.xlu0 %65
  %vm67 = vcmp.lt.s32.totalorder %v22, 127
  %v68 = vsel %vm67, %v64, %v66
  %v69 = vsel %vm67, %v62, %v64
  %v70 = vsel %vm67, %v58, %v62
  %v71 = vsel %vm67, %v66, %v58
  %v72 = vpack.c.bf16 %v60, %v70
  %v73 = vpack.c.bf16 %v60, %v69
  %v74 = vpack.c.bf16 %v60, %v68
  %v75 = vpack.c.bf16 %v60, %v71
  %76 = vrot.lane.b32.xlu0 %v47, 126
  %v77 = vpop.permute.xlu0 %76
  %78 = vrot.lane.b32.xlu0 0.0, 126
  %v79 = vpop.permute.xlu0 %78
  %80 = vrot.lane.b32.xlu0 %v48, 126
  %v81 = vpop.permute.xlu0 %80
  %82 = vrot.lane.b32.xlu0 %v49, 126
  %v83 = vpop.permute.xlu0 %82
  %84 = vrot.lane.b32.xlu0 %v50, 126
  %v85 = vpop.permute.xlu0 %84
  %vm86 = vcmp.lt.s32.totalorder %v22, 126
  %v87 = vsel %vm86, %v83, %v85
  %v88 = vsel %vm86, %v81, %v83
  %v89 = vsel %vm86, %v77, %v81
  %v90 = vsel %vm86, %v85, %v77
  %v91 = vpack.c.bf16 %v79, %v89
  %v92 = vpack.c.bf16 %v79, %v88
  %v93 = vpack.c.bf16 %v79, %v87
  %v94 = vpack.c.bf16 %v79, %v90
  %95 = vrot.lane.b32.xlu0 %v47, 112
  %v96 = vpop.permute.xlu0 %95
  %97 = vrot.lane.b32.xlu0 0.0, 112
  %v98 = vpop.permute.xlu0 %97
  %99 = vrot.lane.b32.xlu0 %v48, 112
  %v100 = vpop.permute.xlu0 %99
  %101 = vrot.lane.b32.xlu0 %v49, 112
  %v102 = vpop.permute.xlu0 %101
  %103 = vrot.lane.b32.xlu0 %v50, 112
  %v104 = vpop.permute.xlu0 %103
  %vm105 = vcmp.lt.s32.totalorder %v22, 112
  %v106 = vsel %vm105, %v102, %v104
  %v107 = vsel %vm105, %v100, %v102
  %v108 = vsel %vm105, %v96, %v100
  %v109 = vsel %vm105, %v104, %v96
  %v110 = vpack.c.bf16 %v98, %v108
  %v111 = vpack.c.bf16 %v98, %v107
  %v112 = vpack.c.bf16 %v98, %v106
  %v113 = vpack.c.bf16 %v98, %v109
  %114 = vrot.lane.b32.xlu0 %v47, 111
  %v115 = vpop.permute.xlu0 %114
  %116 = vrot.lane.b32.xlu0 0.0, 111
  %v117 = vpop.permute.xlu0 %116
  %118 = vrot.lane.b32.xlu0 %v48, 111
  %v119 = vpop.permute.xlu0 %118
  %120 = vrot.lane.b32.xlu0 %v49, 111
  %v121 = vpop.permute.xlu0 %120
  %122 = vrot.lane.b32.xlu0 %v50, 111
  %v123 = vpop.permute.xlu0 %122
  %vm124 = vcmp.lt.s32.totalorder %v22, 111
  %v125 = vsel %vm124, %v121, %v123
  %v126 = vsel %vm124, %v119, %v121
  %v127 = vsel %vm124, %v115, %v119
  %v128 = vsel %vm124, %v123, %v115
  %v129 = vpack.c.bf16 %v117, %v127
  %v130 = vpack.c.bf16 %v117, %v126
  %v131 = vpack.c.bf16 %v117, %v125
  %v132 = vpack.c.bf16 %v117, %v128
  %133 = vrot.lane.b32.xlu0 %v47, 110
  %v134 = vpop.permute.xlu0 %133
  %135 = vrot.lane.b32.xlu0 0.0, 110
  %v136 = vpop.permute.xlu0 %135
  %137 = vrot.lane.b32.xlu0 %v48, 110
  %v138 = vpop.permute.xlu0 %137
  %139 = vrot.lane.b32.xlu0 %v49, 110
  %v140 = vpop.permute.xlu0 %139
  %141 = vrot.lane.b32.xlu0 %v50, 110
  %v142 = vpop.permute.xlu0 %141
  %vm143 = vcmp.lt.s32.totalorder %v22, 110
  %v144 = vsel %vm143, %v140, %v142
  %v145 = vsel %vm143, %v138, %v140
  %v146 = vsel %vm143, %v134, %v138
  %v147 = vsel %vm143, %v142, %v134
  %v148 = vpack.c.bf16 %v136, %v146
  %v149 = vpack.c.bf16 %v136, %v145
  %v150 = vpack.c.bf16 %v136, %v144
  %v151 = vpack.c.bf16 %v136, %v147
  %152 = vrot.lane.b32.xlu0 %v47, 96
  %v153 = vpop.permute.xlu0 %152
  %154 = vrot.lane.b32.xlu0 0.0, 96
  %v155 = vpop.permute.xlu0 %154
  %156 = vrot.lane.b32.xlu0 %v48, 96
  %v157 = vpop.permute.xlu0 %156
  %158 = vrot.lane.b32.xlu0 %v49, 96
  %v159 = vpop.permute.xlu0 %158
  %160 = vrot.lane.b32.xlu0 %v50, 96
  %v161 = vpop.permute.xlu0 %160
  %vm162 = vcmp.lt.s32.totalorder %v22, 96
  %v163 = vsel %vm162, %v159, %v161
  %v164 = vsel %vm162, %v157, %v159
  %v165 = vsel %vm162, %v153, %v157
  %v166 = vsel %vm162, %v161, %v153
  %v167 = vpack.c.bf16 %v155, %v165
  %v168 = vpack.c.bf16 %v155, %v164
  %v169 = vpack.c.bf16 %v155, %v163
  %v170 = vpack.c.bf16 %v155, %v166
  %171 = vrot.lane.b32.xlu0 %v47, 95
  %v172 = vpop.permute.xlu0 %171
  %173 = vrot.lane.b32.xlu0 0.0, 95
  %v174 = vpop.permute.xlu0 %173
  %175 = vrot.lane.b32.xlu0 %v48, 95
  %v176 = vpop.permute.xlu0 %175
  %177 = vrot.lane.b32.xlu0 %v49, 95
  %v178 = vpop.permute.xlu0 %177
  %179 = vrot.lane.b32.xlu0 %v50, 95
  %v180 = vpop.permute.xlu0 %179
  %vm181 = vcmp.lt.s32.totalorder %v22, 95
  %v182 = vsel %vm181, %v178, %v180
  %v183 = vsel %vm181, %v176, %v178
  %v184 = vsel %vm181, %v172, %v176
  %v185 = vsel %vm181, %v180, %v172
  %v186 = vpack.c.bf16 %v174, %v184
  %v187 = vpack.c.bf16 %v174, %v183
  %v188 = vpack.c.bf16 %v174, %v182
  %v189 = vpack.c.bf16 %v174, %v185
  %190 = vrot.lane.b32.xlu0 %v47, 94
  %v191 = vpop.permute.xlu0 %190
  %192 = vrot.lane.b32.xlu0 0.0, 94
  %v193 = vpop.permute.xlu0 %192
  %194 = vrot.lane.b32.xlu0 %v48, 94
  %v195 = vpop.permute.xlu0 %194
  %196 = vrot.lane.b32.xlu0 %v49, 94
  %v197 = vpop.permute.xlu0 %196
  %198 = vrot.lane.b32.xlu0 %v50, 94
  %v199 = vpop.permute.xlu0 %198
  %vm200 = vcmp.lt.s32.totalorder %v22, 94
  %v201 = vsel %vm200, %v197, %v199
  %v202 = vsel %vm200, %v195, %v197
  %v203 = vsel %vm200, %v191, %v195
  %v204 = vsel %vm200, %v199, %v191
  %v205 = vpack.c.bf16 %v193, %v203
  %v206 = vpack.c.bf16 %v193, %v202
  %v207 = vpack.c.bf16 %v193, %v201
  %v208 = vpack.c.bf16 %v193, %v204
  %v211 = vunpack.c.l.b16 %v51
  %v212 = vunpack.c.h.b16 %v51
  %v213 = vunpack.c.l.b16 %v52
  %v214 = vunpack.c.h.b16 %v52
  %v215 = vpack.c.b16 %v213, %v211
  %v216 = vpack.c.b16 %v214, %v212
  %vm218 = vcmask 130048
  %v220 = vsel %vm218, %v216, 0
  %222 = vmatprep.subr.bf16.mxu0 %v54
  %223 = vmatpush1.bf16.msra.mxu0 %v53
  %224 = vmatprep.subr.bf16.mxu0 %v73
  %225 = vmatpush1.bf16.msra.mxu0 %v72
  %226 = vmatprep.subr.bf16.mxu0 %v92
  %227 = vmatpush1.bf16.msra.mxu0 %v91
  %228 = vmatprep.subr.bf16.mxu0 %v111
  %229 = vmatpush1.bf16.msra.mxu0 %v110
  %230 = vmatprep.subr.bf16.mxu0 %v130
  %231 = vmatpush1.bf16.msra.mxu0 %v129
  %232 = vmatprep.subr.bf16.mxu0 %v149
  %233 = vmatpush1.bf16.msra.mxu0 %v148
  %234 = vmatprep.subr.bf16.mxu0 %v168
  %235 = vmatpush1.bf16.msra.mxu0 %v167
  %236 = vmatprep.subr.bf16.mxu0 %v187
  %237 = vmatpush1.bf16.msra.mxu0 %v186
  %238 = vmatprep.subr.bf16.mxu0 %v206
  %239 = vmatpush1.bf16.msra.mxu0 %v205
  %240 = vmatprep.subr.bf16.mxu0 0
  %241 = vmatpush1.bf16.msra.mxu0 0
  %242 = vmatprep.subr.bf16.mxu0 0
  %243 = vmatpush1.bf16.msra.mxu0 0
  %244 = vmatprep.subr.bf16.mxu0 0
  %245 = vmatpush1.bf16.msra.mxu0 0
  %246 = vmatprep.subr.bf16.mxu0 0
  %247 = vmatpush1.bf16.msra.mxu0 0
  %248 = vmatprep.subr.bf16.mxu0 0
  %249 = vmatpush1.bf16.msra.mxu0 0
  %250 = vmatprep.subr.bf16.mxu0 0
  %251 = vmatpush1.bf16.msra.mxu0 0
  %252 = vmatprep.subr.bf16.mxu0 0
  %253 = vmatpush1.bf16.msra.mxu0 0
  %254 = vmatprep.mubr.bf16.mxu0 %v220
  %255 = vmatmul.mubr.bf16.gmra.mrb[0].mxu0 %v215
  %v256 = vpop.f32.mrb[0].mxu0
  %v257 = vadd.f32 0.0, %v256
  %v258 = vpop.f32.mrb[0].mxu0
  %v259 = vadd.f32 0.0, %v258
  %v260 = vpop.f32.mrb[0].mxu0
  %v261 = vadd.f32 0.0, %v260
  %v262 = vpop.f32.mrb[0].mxu0
  %v263 = vadd.f32 0.0, %v262
  %264 = vdwg.mxu0
  %265 = vmatprep.subr.bf16.mxu0 %v56
  %266 = vmatpush1.bf16.msra.mxu0 %v55
  %267 = vmatprep.subr.bf16.mxu0 %v75
  %268 = vmatpush1.bf16.msra.mxu0 %v74
  %269 = vmatprep.subr.bf16.mxu0 %v94
  %270 = vmatpush1.bf16.msra.mxu0 %v93
  %271 = vmatprep.subr.bf16.mxu0 %v113
  %272 = vmatpush1.bf16.msra.mxu0 %v112
  %273 = vmatprep.subr.bf16.mxu0 %v132
  %274 = vmatpush1.bf16.msra.mxu0 %v131
  %275 = vmatprep.subr.bf16.mxu0 %v151
  %276 = vmatpush1.bf16.msra.mxu0 %v150
  %277 = vmatprep.subr.bf16.mxu0 %v170
  %278 = vmatpush1.bf16.msra.mxu0 %v169
  %279 = vmatprep.subr.bf16.mxu0 %v189
  %280 = vmatpush1.bf16.msra.mxu0 %v188
  %281 = vmatprep.subr.bf16.mxu0 %v208
  %282 = vmatpush1.bf16.msra.mxu0 %v207
  %283 = vmatprep.subr.bf16.mxu0 0
  %284 = vmatpush1.bf16.msra.mxu0 0
  %285 = vmatprep.subr.bf16.mxu0 0
  %286 = vmatpush1.bf16.msra.mxu0 0
  %287 = vmatprep.subr.bf16.mxu0 0
  %288 = vmatpush1.bf16.msra.mxu0 0
  %289 = vmatprep.subr.bf16.mxu0 0
  %290 = vmatpush1.bf16.msra.mxu0 0
  %291 = vmatprep.subr.bf16.mxu0 0
  %292 = vmatpush1.bf16.msra.mxu0 0
  %293 = vmatprep.subr.bf16.mxu0 0
  %294 = vmatpush1.bf16.msra.mxu0 0
  %295 = vmatprep.subr.bf16.mxu0 0
  %296 = vmatpush1.bf16.msra.mxu0 0
  %297 = vmatprep.mubr.bf16.mxu0 %v220
  %298 = vmatmul.mubr.bf16.gmra.mrb[0].mxu0 %v215
  %v299 = vpop.f32.mrb[0].mxu0
  %v300 = vadd.f32 0.0, %v299
  %v301 = vpop.f32.mrb[0].mxu0
  %v302 = vadd.f32 0.0, %v301
  %v303 = vpop.f32.mrb[0].mxu0
  %v304 = vadd.f32 0.0, %v303
  %v305 = vpop.f32.mrb[0].mxu0
  %v306 = vadd.f32 0.0, %v305
  %307 = vdwg.mxu0
  %v308 = vld [vmem:[%s3] sm:$0xff]
  %v309 = vld [vmem:[%s3 + $0x8] sm:$0xff]
  %s310 = scalar_lea.vmem %s3, 16
  %v311 = vld [vmem:[%s310] sm:$0xff]
  %v312 = vld [vmem:[%s310 + $0x8] sm:$0xff]
  %vm313 = vcmp.lt.s32.totalorder %v34, 14
  %vm314 = vcmp.lt.s32.totalorder %v35, 14
  %vm315 = vcmp.lt.s32.totalorder %v36, 14
  %vm316 = vcmp.lt.s32.totalorder %v37, 14
  %vm317 = vcmp.lt.s32.totalorder %v26, 14
  %vm318 = vcmp.lt.s32.totalorder %v27, 14
  %vm319 = vcmp.lt.s32.totalorder %v28, 14
  %vm320 = vcmp.lt.s32.totalorder %v29, 14
  %vm321 = vmand %vm313, %vm317
  %vm322 = vmand %vm314, %vm318
  %vm323 = vmand %vm315, %vm319
  %vm324 = vmand %vm316, %vm320
  %v325 = vsel %vm321, 1, 0
  %v326 = vsel %vm322, 1, 0
  %v327 = vsel %vm323, 1, 0
  %v328 = vsel %vm324, 1, 0
  %v329 = vcvt.s32.f32 %v325
  %v330 = vcvt.s32.f32 %v326
  %v331 = vcvt.s32.f32 %v327
  %v332 = vcvt.s32.f32 %v328
  %v333 = vmul.f32 %v257, %v329
  %v334 = vmul.f32 %v259, %v330
  %v335 = vmul.f32 %v300, %v331
  %v336 = vmul.f32 %v302, %v332
  %v337 = vmul.f32 %v261, %v329
  %v338 = vmul.f32 %v263, %v330
  %v339 = vmul.f32 %v304, %v331
  %v340 = vmul.f32 %v306, %v332
  %v341 = vmul.f32 %v333, %v333
  %v342 = vmul.f32 %v334, %v334
  %v343 = vmul.f32 %v335, %v335
  %v344 = vmul.f32 %v336, %v336
  %v345 = vmul.f32 %v337, %v337
  %v346 = vmul.f32 %v338, %v338
  %v347 = vmul.f32 %v339, %v339
  %v348 = vmul.f32 %v340, %v340
  %v349 = vadd.f32 %v333, %v334
  %v350 = vadd.f32 %v349, %v335
  %v351 = vadd.f32 %v350, %v336
  %352 = vadd.xlane.f32.xlu0 %v351
  %v353 = vpop.xlane.xlu0 %352
  %v354 = vadd.f32 %v337, %v338
  %v355 = vadd.f32 %v354, %v339
  %v356 = vadd.f32 %v355, %v340
  %357 = vadd.xlane.f32.xlu0 %v356
  %v358 = vpop.xlane.xlu0 %357
  %v359 = vadd.f32 %v341, %v342
  %v360 = vadd.f32 %v359, %v343
  %v361 = vadd.f32 %v360, %v344
  %362 = vadd.xlane.f32.xlu0 %v361
  %v363 = vpop.xlane.xlu0 %362
  %v364 = vadd.f32 %v345, %v346
  %v365 = vadd.f32 %v364, %v347
  %v366 = vadd.f32 %v365, %v348
  %367 = vadd.xlane.f32.xlu0 %v366
  %v368 = vpop.xlane.xlu0 %367
  %v369 = vmul.f32 %v353, 0.0025510204
  %v370 = vmul.f32 %v358, 0.0025510204
  %v371 = vmul.f32 %v363, 0.0025510204
  %v372 = vmul.f32 %v368, 0.0025510204
  %v373 = vmul.f32 %v369, %v369
  %v374 = vmul.f32 %v370, %v370
  %v375 = vsub.f32 %v371, %v373
  %v376 = vsub.f32 %v372, %v374
  %v377 = vadd.f32 %v375, 1e-05
  %v378 = vadd.f32 %v376, 1e-05
  %v379 = vrsqrt.pop %v377
  %v380 = vrsqrt.pop %v378
  %v381 = vmul.f32 %v308, %v379
  %v382 = vmul.f32 %v309, %v380
  %v383 = vmul.f32 %v369, %v381
  %v384 = vmul.f32 %v370, %v382
  %v385 = vsub.f32 %v311, %v383
  %v386 = vsub.f32 %v312, %v384
  %388 = vset.pattern.permute.xlu0 0
  %389 = vperm.xlu0 %388, %v381
  %v390 = vpop.permute.xlu0 %389
  %393 = vset.pattern.permute.xlu0 0
  %394 = vperm.xlu0 %393, %v382
  %v395 = vpop.permute.xlu0 %394
  %v397 = vmul.f32 %v257, %v390
  %v398 = vmul.f32 %v259, %v390
  %v399 = vmul.f32 %v300, %v390
  %v400 = vmul.f32 %v302, %v390
  %v401 = vmul.f32 %v261, %v395
  %v402 = vmul.f32 %v263, %v395
  %v403 = vmul.f32 %v304, %v395
  %v404 = vmul.f32 %v306, %v395
  %406 = vset.pattern.permute.xlu0 0
  %407 = vperm.xlu0 %406, %v385
  %v408 = vpop.permute.xlu0 %407
  %411 = vset.pattern.permute.xlu0 0
  %412 = vperm.xlu0 %411, %v386
  %v413 = vpop.permute.xlu0 %412
  %v415 = vadd.f32 %v397, %v408
  %v416 = vadd.f32 %v398, %v408
  %v417 = vadd.f32 %v399, %v408
  %v418 = vadd.f32 %v400, %v408
  %v419 = vadd.f32 %v401, %v413
  %v420 = vadd.f32 %v402, %v413
  %v421 = vadd.f32 %v403, %v413
  %v422 = vadd.f32 %v404, %v413
  %vm423 = vcmp.ge.f32.partialorder %v415, 0.0
  %vm424 = vcmp.ge.f32.partialorder %v416, 0.0
  %vm425 = vcmp.ge.f32.partialorder %v417, 0.0
  %vm426 = vcmp.ge.f32.partialorder %v418, 0.0
  %vm427 = vcmp.ge.f32.partialorder %v419, 0.0
  %vm428 = vcmp.ge.f32.partialorder %v420, 0.0
  %vm429 = vcmp.ge.f32.partialorder %v421, 0.0
  %vm430 = vcmp.ge.f32.partialorder %v422, 0.0
  %v431 = vmul.f32 %v415, 0.2
  %v432 = vmul.f32 %v416, 0.2
  %v433 = vmul.f32 %v417, 0.2
  %v434 = vmul.f32 %v418, 0.2
  %v435 = vmul.f32 %v419, 0.2
  %v436 = vmul.f32 %v420, 0.2
  %v437 = vmul.f32 %v421, 0.2
  %v438 = vmul.f32 %v422, 0.2
  %v439 = vsel %vm423, %v415, %v431
  %v440 = vsel %vm424, %v416, %v432
  %v441 = vsel %vm425, %v417, %v433
  %v442 = vsel %vm426, %v418, %v434
  %v443 = vsel %vm427, %v419, %v435
  %v444 = vsel %vm428, %v420, %v436
  %v445 = vsel %vm429, %v421, %v437
  %v446 = vsel %vm430, %v422, %v438
  %s447 = scalar_lea.vmem %s2, 16
  %v448 = vld [vmem:[%s447] sm:$0xff]
  %v449 = vld [vmem:[%s447 + $0x8] sm:$0xff]
  %v450 = vpack.c.bf16 %v443, %v439
  %v451 = vpack.c.bf16 %v444, %v440
  %v452 = vpack.c.bf16 %v445, %v441
  %v453 = vpack.c.bf16 %v446, %v442
  %454 = vrot.lane.b32.xlu0 %v439, 127
  %v455 = vpop.permute.xlu0 %454
  %456 = vrot.lane.b32.xlu0 %v443, 127
  %v457 = vpop.permute.xlu0 %456
  %458 = vrot.lane.b32.xlu0 %v440, 127
  %v459 = vpop.permute.xlu0 %458
  %460 = vrot.lane.b32.xlu0 %v444, 127
  %v461 = vpop.permute.xlu0 %460
  %462 = vrot.lane.b32.xlu0 %v441, 127
  %v463 = vpop.permute.xlu0 %462
  %464 = vrot.lane.b32.xlu0 %v445, 127
  %v465 = vpop.permute.xlu0 %464
  %466 = vrot.lane.b32.xlu0 %v442, 127
  %v467 = vpop.permute.xlu0 %466
  %468 = vrot.lane.b32.xlu0 %v446, 127
  %v469 = vpop.permute.xlu0 %468
  %v470 = vsel %vm67, %v463, %v467
  %v471 = vsel %vm67, %v465, %v469
  %v472 = vsel %vm67, %v459, %v463
  %v473 = vsel %vm67, %v461, %v465
  %v474 = vsel %vm67, %v455, %v459
  %v475 = vsel %vm67, %v457, %v461
  %v476 = vsel %vm67, %v467, %v455
  %v477 = vsel %vm67, %v469, %v457
  %v478 = vpack.c.bf16 %v475, %v474
  %v479 = vpack.c.bf16 %v473, %v472
  %v480 = vpack.c.bf16 %v471, %v470
  %v481 = vpack.c.bf16 %v477, %v476
  %482 = vrot.lane.b32.xlu0 %v439, 126
  %v483 = vpop.permute.xlu0 %482
  %484 = vrot.lane.b32.xlu0 %v443, 126
  %v485 = vpop.permute.xlu0 %484
  %486 = vrot.lane.b32.xlu0 %v440, 126
  %v487 = vpop.permute.xlu0 %486
  %488 = vrot.lane.b32.xlu0 %v444, 126
  %v489 = vpop.permute.xlu0 %488
  %490 = vrot.lane.b32.xlu0 %v441, 126
  %v491 = vpop.permute.xlu0 %490
  %492 = vrot.lane.b32.xlu0 %v445, 126
  %v493 = vpop.permute.xlu0 %492
  %494 = vrot.lane.b32.xlu0 %v442, 126
  %v495 = vpop.permute.xlu0 %494
  %496 = vrot.lane.b32.xlu0 %v446, 126
  %v497 = vpop.permute.xlu0 %496
  %v498 = vsel %vm86, %v491, %v495
  %v499 = vsel %vm86, %v493, %v497
  %v500 = vsel %vm86, %v487, %v491
  %v501 = vsel %vm86, %v489, %v493
  %v502 = vsel %vm86, %v483, %v487
  %v503 = vsel %vm86, %v485, %v489
  %v504 = vsel %vm86, %v495, %v483
  %v505 = vsel %vm86, %v497, %v485
  %v506 = vpack.c.bf16 %v503, %v502
  %v507 = vpack.c.bf16 %v501, %v500
  %v508 = vpack.c.bf16 %v499, %v498
  %v509 = vpack.c.bf16 %v505, %v504
  %510 = vrot.lane.b32.xlu0 %v439, 112
  %v511 = vpop.permute.xlu0 %510
  %512 = vrot.lane.b32.xlu0 %v443, 112
  %v513 = vpop.permute.xlu0 %512
  %514 = vrot.lane.b32.xlu0 %v440, 112
  %v515 = vpop.permute.xlu0 %514
  %516 = vrot.lane.b32.xlu0 %v444, 112
  %v517 = vpop.permute.xlu0 %516
  %518 = vrot.lane.b32.xlu0 %v441, 112
  %v519 = vpop.permute.xlu0 %518
  %520 = vrot.lane.b32.xlu0 %v445, 112
  %v521 = vpop.permute.xlu0 %520
  %522 = vrot.lane.b32.xlu0 %v442, 112
  %v523 = vpop.permute.xlu0 %522
  %524 = vrot.lane.b32.xlu0 %v446, 112
  %v525 = vpop.permute.xlu0 %524
  %v526 = vsel %vm105, %v519, %v523
  %v527 = vsel %vm105, %v521, %v525
  %v528 = vsel %vm105, %v515, %v519
  %v529 = vsel %vm105, %v517, %v521
  %v530 = vsel %vm105, %v511, %v515
  %v531 = vsel %vm105, %v513, %v517
  %v532 = vsel %vm105, %v523, %v511
  %v533 = vsel %vm105, %v525, %v513
  %v534 = vpack.c.bf16 %v531, %v530
  %v535 = vpack.c.bf16 %v529, %v528
  %v536 = vpack.c.bf16 %v527, %v526
  %v537 = vpack.c.bf16 %v533, %v532
  %538 = vrot.lane.b32.xlu0 %v439, 111
  %v539 = vpop.permute.xlu0 %538
  %540 = vrot.lane.b32.xlu0 %v443, 111
  %v541 = vpop.permute.xlu0 %540
  %542 = vrot.lane.b32.xlu0 %v440, 111
  %v543 = vpop.permute.xlu0 %542
  %544 = vrot.lane.b32.xlu0 %v444, 111
  %v545 = vpop.permute.xlu0 %544
  %546 = vrot.lane.b32.xlu0 %v441, 111
  %v547 = vpop.permute.xlu0 %546
  %548 = vrot.lane.b32.xlu0 %v445, 111
  %v549 = vpop.permute.xlu0 %548
  %550 = vrot.lane.b32.xlu0 %v442, 111
  %v551 = vpop.permute.xlu0 %550
  %552 = vrot.lane.b32.xlu0 %v446, 111
  %v553 = vpop.permute.xlu0 %552
  %v554 = vsel %vm124, %v547, %v551
  %v555 = vsel %vm124, %v549, %v553
  %v556 = vsel %vm124, %v543, %v547
  %v557 = vsel %vm124, %v545, %v549
  %v558 = vsel %vm124, %v539, %v543
  %v559 = vsel %vm124, %v541, %v545
  %v560 = vsel %vm124, %v551, %v539
  %v561 = vsel %vm124, %v553, %v541
  %v562 = vpack.c.bf16 %v559, %v558
  %v563 = vpack.c.bf16 %v557, %v556
  %v564 = vpack.c.bf16 %v555, %v554
  %v565 = vpack.c.bf16 %v561, %v560
  %566 = vrot.lane.b32.xlu0 %v439, 110
  %v567 = vpop.permute.xlu0 %566
  %568 = vrot.lane.b32.xlu0 %v443, 110
  %v569 = vpop.permute.xlu0 %568
  %570 = vrot.lane.b32.xlu0 %v440, 110
  %v571 = vpop.permute.xlu0 %570
  %572 = vrot.lane.b32.xlu0 %v444, 110
  %v573 = vpop.permute.xlu0 %572
  %574 = vrot.lane.b32.xlu0 %v441, 110
  %v575 = vpop.permute.xlu0 %574
  %576 = vrot.lane.b32.xlu0 %v445, 110
  %v577 = vpop.permute.xlu0 %576
  %578 = vrot.lane.b32.xlu0 %v442, 110
  %v579 = vpop.permute.xlu0 %578
  %580 = vrot.lane.b32.xlu0 %v446, 110
  %v581 = vpop.permute.xlu0 %580
  %v582 = vsel %vm143, %v575, %v579
  %v583 = vsel %vm143, %v577, %v581
  %v584 = vsel %vm143, %v571, %v575
  %v585 = vsel %vm143, %v573, %v577
  %v586 = vsel %vm143, %v567, %v571
  %v587 = vsel %vm143, %v569, %v573
  %v588 = vsel %vm143, %v579, %v567
  %v589 = vsel %vm143, %v581, %v569
  %v590 = vpack.c.bf16 %v587, %v586
  %v591 = vpack.c.bf16 %v585, %v584
  %v592 = vpack.c.bf16 %v583, %v582
  %v593 = vpack.c.bf16 %v589, %v588
  %594 = vrot.lane.b32.xlu0 %v439, 96
  %v595 = vpop.permute.xlu0 %594
  %596 = vrot.lane.b32.xlu0 %v443, 96
  %v597 = vpop.permute.xlu0 %596
  %598 = vrot.lane.b32.xlu0 %v440, 96
  %v599 = vpop.permute.xlu0 %598
  %600 = vrot.lane.b32.xlu0 %v444, 96
  %v601 = vpop.permute.xlu0 %600
  %602 = vrot.lane.b32.xlu0 %v441, 96
  %v603 = vpop.permute.xlu0 %602
  %604 = vrot.lane.b32.xlu0 %v445, 96
  %v605 = vpop.permute.xlu0 %604
  %606 = vrot.lane.b32.xlu0 %v442, 96
  %v607 = vpop.permute.xlu0 %606
  %608 = vrot.lane.b32.xlu0 %v446, 96
  %v609 = vpop.permute.xlu0 %608
  %v610 = vsel %vm162, %v603, %v607
  %v611 = vsel %vm162, %v605, %v609
  %v612 = vsel %vm162, %v599, %v603
  %v613 = vsel %vm162, %v601, %v605
  %v614 = vsel %vm162, %v595, %v599
  %v615 = vsel %vm162, %v597, %v601
  %v616 = vsel %vm162, %v607, %v595
  %v617 = vsel %vm162, %v609, %v597
  %v618 = vpack.c.bf16 %v615, %v614
  %v619 = vpack.c.bf16 %v613, %v612
  %v620 = vpack.c.bf16 %v611, %v610
  %v621 = vpack.c.bf16 %v617, %v616
  %622 = vrot.lane.b32.xlu0 %v439, 95
  %v623 = vpop.permute.xlu0 %622
  %624 = vrot.lane.b32.xlu0 %v443, 95
  %v625 = vpop.permute.xlu0 %624
  %626 = vrot.lane.b32.xlu0 %v440, 95
  %v627 = vpop.permute.xlu0 %626
  %628 = vrot.lane.b32.xlu0 %v444, 95
  %v629 = vpop.permute.xlu0 %628
  %630 = vrot.lane.b32.xlu0 %v441, 95
  %v631 = vpop.permute.xlu0 %630
  %632 = vrot.lane.b32.xlu0 %v445, 95
  %v633 = vpop.permute.xlu0 %632
  %634 = vrot.lane.b32.xlu0 %v442, 95
  %v635 = vpop.permute.xlu0 %634
  %636 = vrot.lane.b32.xlu0 %v446, 95
  %v637 = vpop.permute.xlu0 %636
  %v638 = vsel %vm181, %v631, %v635
  %v639 = vsel %vm181, %v633, %v637
  %v640 = vsel %vm181, %v627, %v631
  %v641 = vsel %vm181, %v629, %v633
  %v642 = vsel %vm181, %v623, %v627
  %v643 = vsel %vm181, %v625, %v629
  %v644 = vsel %vm181, %v635, %v623
  %v645 = vsel %vm181, %v637, %v625
  %v646 = vpack.c.bf16 %v643, %v642
  %v647 = vpack.c.bf16 %v641, %v640
  %v648 = vpack.c.bf16 %v639, %v638
  %v649 = vpack.c.bf16 %v645, %v644
  %650 = vrot.lane.b32.xlu0 %v439, 94
  %v651 = vpop.permute.xlu0 %650
  %652 = vrot.lane.b32.xlu0 %v443, 94
  %v653 = vpop.permute.xlu0 %652
  %654 = vrot.lane.b32.xlu0 %v440, 94
  %v655 = vpop.permute.xlu0 %654
  %656 = vrot.lane.b32.xlu0 %v444, 94
  %v657 = vpop.permute.xlu0 %656
  %658 = vrot.lane.b32.xlu0 %v441, 94
  %v659 = vpop.permute.xlu0 %658
  %660 = vrot.lane.b32.xlu0 %v445, 94
  %v661 = vpop.permute.xlu0 %660
  %662 = vrot.lane.b32.xlu0 %v442, 94
  %v663 = vpop.permute.xlu0 %662
  %664 = vrot.lane.b32.xlu0 %v446, 94
  %v665 = vpop.permute.xlu0 %664
  %v666 = vsel %vm200, %v659, %v663
  %v667 = vsel %vm200, %v661, %v665
  %v668 = vsel %vm200, %v655, %v659
  %v669 = vsel %vm200, %v657, %v661
  %v670 = vsel %vm200, %v651, %v655
  %v671 = vsel %vm200, %v653, %v657
  %v672 = vsel %vm200, %v663, %v651
  %v673 = vsel %vm200, %v665, %v653
  %v674 = vpack.c.bf16 %v671, %v670
  %v675 = vpack.c.bf16 %v669, %v668
  %v676 = vpack.c.bf16 %v667, %v666
  %v677 = vpack.c.bf16 %v673, %v672
  %v680 = vunpack.c.l.b16 %v448
  %v681 = vunpack.c.h.b16 %v448
  %v682 = vunpack.c.l.b16 %v449
  %v683 = vunpack.c.h.b16 %v449
  %v684 = vpack.c.b16 %v682, %v680
  %v685 = vpack.c.b16 %v683, %v681
  %v688 = vsel %vm218, %v685, 0
  %690 = vmatprep.subr.bf16.mxu0 %v451
  %691 = vmatpush1.bf16.msra.mxu0 %v450
  %692 = vmatprep.subr.bf16.mxu0 %v479
  %693 = vmatpush1.bf16.msra.mxu0 %v478
  %694 = vmatprep.subr.bf16.mxu0 %v507
  %695 = vmatpush1.bf16.msra.mxu0 %v506
  %696 = vmatprep.subr.bf16.mxu0 %v535
  %697 = vmatpush1.bf16.msra.mxu0 %v534
  %698 = vmatprep.subr.bf16.mxu0 %v563
  %699 = vmatpush1.bf16.msra.mxu0 %v562
  %700 = vmatprep.subr.bf16.mxu0 %v591
  %701 = vmatpush1.bf16.msra.mxu0 %v590
  %702 = vmatprep.subr.bf16.mxu0 %v619
  %703 = vmatpush1.bf16.msra.mxu0 %v618
  %704 = vmatprep.subr.bf16.mxu0 %v647
  %705 = vmatpush1.bf16.msra.mxu0 %v646
  %706 = vmatprep.subr.bf16.mxu0 %v675
  %707 = vmatpush1.bf16.msra.mxu0 %v674
  %708 = vmatprep.subr.bf16.mxu0 0
  %709 = vmatpush1.bf16.msra.mxu0 0
  %710 = vmatprep.subr.bf16.mxu0 0
  %711 = vmatpush1.bf16.msra.mxu0 0
  %712 = vmatprep.subr.bf16.mxu0 0
  %713 = vmatpush1.bf16.msra.mxu0 0
  %714 = vmatprep.subr.bf16.mxu0 0
  %715 = vmatpush1.bf16.msra.mxu0 0
  %716 = vmatprep.subr.bf16.mxu0 0
  %717 = vmatpush1.bf16.msra.mxu0 0
  %718 = vmatprep.subr.bf16.mxu0 0
  %719 = vmatpush1.bf16.msra.mxu0 0
  %720 = vmatprep.subr.bf16.mxu0 0
  %721 = vmatpush1.bf16.msra.mxu0 0
  %722 = vmatprep.mubr.bf16.mxu0 %v688
  %723 = vmatmul.mubr.bf16.gmra.mrb[0].mxu0 %v684
  %v724 = vpop.f32.mrb[0].mxu0
  %v725 = vadd.f32 0.0, %v724
  %v726 = vpop.f32.mrb[0].mxu0
  %v727 = vadd.f32 0.0, %v726
  %v728 = vpop.f32.mrb[0].mxu0
  %v729 = vadd.f32 0.0, %v728
  %v730 = vpop.f32.mrb[0].mxu0
  %v731 = vadd.f32 0.0, %v730
  %732 = vdwg.mxu0
  %733 = vmatprep.subr.bf16.mxu0 %v453
  %734 = vmatpush1.bf16.msra.mxu0 %v452
  %735 = vmatprep.subr.bf16.mxu0 %v481
  %736 = vmatpush1.bf16.msra.mxu0 %v480
  %737 = vmatprep.subr.bf16.mxu0 %v509
  %738 = vmatpush1.bf16.msra.mxu0 %v508
  %739 = vmatprep.subr.bf16.mxu0 %v537
  %740 = vmatpush1.bf16.msra.mxu0 %v536
  %741 = vmatprep.subr.bf16.mxu0 %v565
  %742 = vmatpush1.bf16.msra.mxu0 %v564
  %743 = vmatprep.subr.bf16.mxu0 %v593
  %744 = vmatpush1.bf16.msra.mxu0 %v592
  %745 = vmatprep.subr.bf16.mxu0 %v621
  %746 = vmatpush1.bf16.msra.mxu0 %v620
  %747 = vmatprep.subr.bf16.mxu0 %v649
  %748 = vmatpush1.bf16.msra.mxu0 %v648
  %749 = vmatprep.subr.bf16.mxu0 %v677
  %750 = vmatpush1.bf16.msra.mxu0 %v676
  %751 = vmatprep.subr.bf16.mxu0 0
  %752 = vmatpush1.bf16.msra.mxu0 0
  %753 = vmatprep.subr.bf16.mxu0 0
  %754 = vmatpush1.bf16.msra.mxu0 0
  %755 = vmatprep.subr.bf16.mxu0 0
  %756 = vmatpush1.bf16.msra.mxu0 0
  %757 = vmatprep.subr.bf16.mxu0 0
  %758 = vmatpush1.bf16.msra.mxu0 0
  %759 = vmatprep.subr.bf16.mxu0 0
  %760 = vmatpush1.bf16.msra.mxu0 0
  %761 = vmatprep.subr.bf16.mxu0 0
  %762 = vmatpush1.bf16.msra.mxu0 0
  %763 = vmatprep.subr.bf16.mxu0 0
  %764 = vmatpush1.bf16.msra.mxu0 0
  %765 = vmatprep.mubr.bf16.mxu0 %v688
  %766 = vmatmul.mubr.bf16.gmra.mrb[0].mxu0 %v684
  %v767 = vpop.f32.mrb[0].mxu0
  %v768 = vadd.f32 0.0, %v767
  %v769 = vpop.f32.mrb[0].mxu0
  %v770 = vadd.f32 0.0, %v769
  %v771 = vpop.f32.mrb[0].mxu0
  %v772 = vadd.f32 0.0, %v771
  %v773 = vpop.f32.mrb[0].mxu0
  %v774 = vadd.f32 0.0, %v773
  %775 = vdwg.mxu0
  %s776 = scalar_lea.vmem %s3, 32
  %v777 = vld [vmem:[%s776] sm:$0xff]
  %v778 = vld [vmem:[%s776 + $0x8] sm:$0xff]
  %s779 = scalar_lea.vmem %s3, 48
  %v780 = vld [vmem:[%s779] sm:$0xff]
  %v781 = vld [vmem:[%s779 + $0x8] sm:$0xff]
  %vm782 = vcmp.lt.s32.totalorder %v34, 12
  %vm783 = vcmp.lt.s32.totalorder %v35, 12
  %vm784 = vcmp.lt.s32.totalorder %v36, 12
  %vm785 = vcmp.lt.s32.totalorder %v37, 12
  %vm786 = vcmp.lt.s32.totalorder %v26, 12
  %vm787 = vcmp.lt.s32.totalorder %v27, 12
  %vm788 = vcmp.lt.s32.totalorder %v28, 12
  %vm789 = vcmp.lt.s32.totalorder %v29, 12
  %vm790 = vmand %vm782, %vm786
  %vm791 = vmand %vm783, %vm787
  %vm792 = vmand %vm784, %vm788
  %vm793 = vmand %vm785, %vm789
  %v794 = vsel %vm790, 1, 0
  %v795 = vsel %vm791, 1, 0
  %v796 = vsel %vm792, 1, 0
  %v797 = vsel %vm793, 1, 0
  %v798 = vcvt.s32.f32 %v794
  %v799 = vcvt.s32.f32 %v795
  %v800 = vcvt.s32.f32 %v796
  %v801 = vcvt.s32.f32 %v797
  %v802 = vmul.f32 %v725, %v798
  %v803 = vmul.f32 %v727, %v799
  %v804 = vmul.f32 %v768, %v800
  %v805 = vmul.f32 %v770, %v801
  %v806 = vmul.f32 %v729, %v798
  %v807 = vmul.f32 %v731, %v799
  %v808 = vmul.f32 %v772, %v800
  %v809 = vmul.f32 %v774, %v801
  %v810 = vmul.f32 %v802, %v802
  %v811 = vmul.f32 %v803, %v803
  %v812 = vmul.f32 %v804, %v804
  %v813 = vmul.f32 %v805, %v805
  %v814 = vmul.f32 %v806, %v806
  %v815 = vmul.f32 %v807, %v807
  %v816 = vmul.f32 %v808, %v808
  %v817 = vmul.f32 %v809, %v809
  %v818 = vadd.f32 %v802, %v803
  %v819 = vadd.f32 %v818, %v804
  %v820 = vadd.f32 %v819, %v805
  %821 = vadd.xlane.f32.xlu0 %v820
  %v822 = vpop.xlane.xlu0 %821
  %v823 = vadd.f32 %v806, %v807
  %v824 = vadd.f32 %v823, %v808
  %v825 = vadd.f32 %v824, %v809
  %826 = vadd.xlane.f32.xlu0 %v825
  %v827 = vpop.xlane.xlu0 %826
  %v828 = vadd.f32 %v810, %v811
  %v829 = vadd.f32 %v828, %v812
  %v830 = vadd.f32 %v829, %v813
  %831 = vadd.xlane.f32.xlu0 %v830
  %v832 = vpop.xlane.xlu0 %831
  %v833 = vadd.f32 %v814, %v815
  %v834 = vadd.f32 %v833, %v816
  %v835 = vadd.f32 %v834, %v817
  %836 = vadd.xlane.f32.xlu0 %v835
  %v837 = vpop.xlane.xlu0 %836
  %v838 = vmul.f32 %v822, 0.0034722222
  %v839 = vmul.f32 %v827, 0.0034722222
  %v840 = vmul.f32 %v832, 0.0034722222
  %v841 = vmul.f32 %v837, 0.0034722222
  %v842 = vmul.f32 %v838, %v838
  %v843 = vmul.f32 %v839, %v839
  %v844 = vsub.f32 %v840, %v842
  %v845 = vsub.f32 %v841, %v843
  %v846 = vadd.f32 %v844, 1e-05
  %v847 = vadd.f32 %v845, 1e-05
  %v848 = vrsqrt.pop %v846
  %v849 = vrsqrt.pop %v847
  %v850 = vmul.f32 %v777, %v848
  %v851 = vmul.f32 %v778, %v849
  %v852 = vmul.f32 %v838, %v850
  %v853 = vmul.f32 %v839, %v851
  %v854 = vsub.f32 %v780, %v852
  %v855 = vsub.f32 %v781, %v853
  %857 = vset.pattern.permute.xlu0 0
  %858 = vperm.xlu0 %857, %v850
  %v859 = vpop.permute.xlu0 %858
  %862 = vset.pattern.permute.xlu0 0
  %863 = vperm.xlu0 %862, %v851
  %v864 = vpop.permute.xlu0 %863
  %v866 = vmul.f32 %v725, %v859
  %v867 = vmul.f32 %v727, %v859
  %v868 = vmul.f32 %v768, %v859
  %v869 = vmul.f32 %v770, %v859
  %v870 = vmul.f32 %v729, %v864
  %v871 = vmul.f32 %v731, %v864
  %v872 = vmul.f32 %v772, %v864
  %v873 = vmul.f32 %v774, %v864
  %875 = vset.pattern.permute.xlu0 0
  %876 = vperm.xlu0 %875, %v854
  %v877 = vpop.permute.xlu0 %876
  %880 = vset.pattern.permute.xlu0 0
  %881 = vperm.xlu0 %880, %v855
  %v882 = vpop.permute.xlu0 %881
  %v884 = vadd.f32 %v866, %v877
  %v885 = vadd.f32 %v867, %v877
  %v886 = vadd.f32 %v868, %v877
  %v887 = vadd.f32 %v869, %v877
  %v888 = vadd.f32 %v870, %v882
  %v889 = vadd.f32 %v871, %v882
  %v890 = vadd.f32 %v872, %v882
  %v891 = vadd.f32 %v873, %v882
  %vm892 = vcmp.ge.f32.partialorder %v884, 0.0
  %vm893 = vcmp.ge.f32.partialorder %v885, 0.0
  %vm894 = vcmp.ge.f32.partialorder %v886, 0.0
  %vm895 = vcmp.ge.f32.partialorder %v887, 0.0
  %vm896 = vcmp.ge.f32.partialorder %v888, 0.0
  %vm897 = vcmp.ge.f32.partialorder %v889, 0.0
  %vm898 = vcmp.ge.f32.partialorder %v890, 0.0
  %vm899 = vcmp.ge.f32.partialorder %v891, 0.0
  %v900 = vmul.f32 %v884, 0.2
  %v901 = vmul.f32 %v885, 0.2
  %v902 = vmul.f32 %v886, 0.2
  %v903 = vmul.f32 %v887, 0.2
  %v904 = vmul.f32 %v888, 0.2
  %v905 = vmul.f32 %v889, 0.2
  %v906 = vmul.f32 %v890, 0.2
  %v907 = vmul.f32 %v891, 0.2
  %v908 = vsel %vm892, %v884, %v900
  %v909 = vsel %vm893, %v885, %v901
  %v910 = vsel %vm894, %v886, %v902
  %v911 = vsel %vm895, %v887, %v903
  %v912 = vsel %vm896, %v888, %v904
  %v913 = vsel %vm897, %v889, %v905
  %v914 = vsel %vm898, %v890, %v906
  %v915 = vsel %vm899, %v891, %v907
  %s916 = scalar_lea.vmem %s2, 32
  %v917 = vld [vmem:[%s916] sm:$0xff]
  %v918 = vld [vmem:[%s916 + $0x8] sm:$0xff]
  %v919 = vpack.c.bf16 %v912, %v908
  %v920 = vpack.c.bf16 %v913, %v909
  %v921 = vpack.c.bf16 %v914, %v910
  %v922 = vpack.c.bf16 %v915, %v911
  %923 = vrot.lane.b32.xlu0 %v908, 127
  %v924 = vpop.permute.xlu0 %923
  %925 = vrot.lane.b32.xlu0 %v912, 127
  %v926 = vpop.permute.xlu0 %925
  %927 = vrot.lane.b32.xlu0 %v909, 127
  %v928 = vpop.permute.xlu0 %927
  %929 = vrot.lane.b32.xlu0 %v913, 127
  %v930 = vpop.permute.xlu0 %929
  %931 = vrot.lane.b32.xlu0 %v910, 127
  %v932 = vpop.permute.xlu0 %931
  %933 = vrot.lane.b32.xlu0 %v914, 127
  %v934 = vpop.permute.xlu0 %933
  %935 = vrot.lane.b32.xlu0 %v911, 127
  %v936 = vpop.permute.xlu0 %935
  %937 = vrot.lane.b32.xlu0 %v915, 127
  %v938 = vpop.permute.xlu0 %937
  %v939 = vsel %vm67, %v932, %v936
  %v940 = vsel %vm67, %v934, %v938
  %v941 = vsel %vm67, %v928, %v932
  %v942 = vsel %vm67, %v930, %v934
  %v943 = vsel %vm67, %v924, %v928
  %v944 = vsel %vm67, %v926, %v930
  %v945 = vsel %vm67, %v936, %v924
  %v946 = vsel %vm67, %v938, %v926
  %v947 = vpack.c.bf16 %v944, %v943
  %v948 = vpack.c.bf16 %v942, %v941
  %v949 = vpack.c.bf16 %v940, %v939
  %v950 = vpack.c.bf16 %v946, %v945
  %951 = vrot.lane.b32.xlu0 %v908, 126
  %v952 = vpop.permute.xlu0 %951
  %953 = vrot.lane.b32.xlu0 %v912, 126
  %v954 = vpop.permute.xlu0 %953
  %955 = vrot.lane.b32.xlu0 %v909, 126
  %v956 = vpop.permute.xlu0 %955
  %957 = vrot.lane.b32.xlu0 %v913, 126
  %v958 = vpop.permute.xlu0 %957
  %959 = vrot.lane.b32.xlu0 %v910, 126
  %v960 = vpop.permute.xlu0 %959
  %961 = vrot.lane.b32.xlu0 %v914, 126
  %v962 = vpop.permute.xlu0 %961
  %963 = vrot.lane.b32.xlu0 %v911, 126
  %v964 = vpop.permute.xlu0 %963
  %965 = vrot.lane.b32.xlu0 %v915, 126
  %v966 = vpop.permute.xlu0 %965
  %v967 = vsel %vm86, %v960, %v964
  %v968 = vsel %vm86, %v962, %v966
  %v969 = vsel %vm86, %v956, %v960
  %v970 = vsel %vm86, %v958, %v962
  %v971 = vsel %vm86, %v952, %v956
  %v972 = vsel %vm86, %v954, %v958
  %v973 = vsel %vm86, %v964, %v952
  %v974 = vsel %vm86, %v966, %v954
  %v975 = vpack.c.bf16 %v972, %v971
  %v976 = vpack.c.bf16 %v970, %v969
  %v977 = vpack.c.bf16 %v968, %v967
  %v978 = vpack.c.bf16 %v974, %v973
  %979 = vrot.lane.b32.xlu0 %v908, 112
  %v980 = vpop.permute.xlu0 %979
  %981 = vrot.lane.b32.xlu0 %v912, 112
  %v982 = vpop.permute.xlu0 %981
  %983 = vrot.lane.b32.xlu0 %v909, 112
  %v984 = vpop.permute.xlu0 %983
  %985 = vrot.lane.b32.xlu0 %v913, 112
  %v986 = vpop.permute.xlu0 %985
  %987 = vrot.lane.b32.xlu0 %v910, 112
  %v988 = vpop.permute.xlu0 %987
  %989 = vrot.lane.b32.xlu0 %v914, 112
  %v990 = vpop.permute.xlu0 %989
  %991 = vrot.lane.b32.xlu0 %v911, 112
  %v992 = vpop.permute.xlu0 %991
  %993 = vrot.lane.b32.xlu0 %v915, 112
  %v994 = vpop.permute.xlu0 %993
  %v995 = vsel %vm105, %v988, %v992
  %v996 = vsel %vm105, %v990, %v994
  %v997 = vsel %vm105, %v984, %v988
  %v998 = vsel %vm105, %v986, %v990
  %v999 = vsel %vm105, %v980, %v984
  %v1000 = vsel %vm105, %v982, %v986
  %v1001 = vsel %vm105, %v992, %v980
  %v1002 = vsel %vm105, %v994, %v982
  %v1003 = vpack.c.bf16 %v1000, %v999
  %v1004 = vpack.c.bf16 %v998, %v997
  %v1005 = vpack.c.bf16 %v996, %v995
  %v1006 = vpack.c.bf16 %v1002, %v1001
  %1007 = vrot.lane.b32.xlu0 %v908, 111
  %v1008 = vpop.permute.xlu0 %1007
  %1009 = vrot.lane.b32.xlu0 %v912, 111
  %v1010 = vpop.permute.xlu0 %1009
  %1011 = vrot.lane.b32.xlu0 %v909, 111
  %v1012 = vpop.permute.xlu0 %1011
  %1013 = vrot.lane.b32.xlu0 %v913, 111
  %v1014 = vpop.permute.xlu0 %1013
  %1015 = vrot.lane.b32.xlu0 %v910, 111
  %v1016 = vpop.permute.xlu0 %1015
  %1017 = vrot.lane.b32.xlu0 %v914, 111
  %v1018 = vpop.permute.xlu0 %1017
  %1019 = vrot.lane.b32.xlu0 %v911, 111
  %v1020 = vpop.permute.xlu0 %1019
  %1021 = vrot.lane.b32.xlu0 %v915, 111
  %v1022 = vpop.permute.xlu0 %1021
  %v1023 = vsel %vm124, %v1016, %v1020
  %v1024 = vsel %vm124, %v1018, %v1022
  %v1025 = vsel %vm124, %v1012, %v1016
  %v1026 = vsel %vm124, %v1014, %v1018
  %v1027 = vsel %vm124, %v1008, %v1012
  %v1028 = vsel %vm124, %v1010, %v1014
  %v1029 = vsel %vm124, %v1020, %v1008
  %v1030 = vsel %vm124, %v1022, %v1010
  %v1031 = vpack.c.bf16 %v1028, %v1027
  %v1032 = vpack.c.bf16 %v1026, %v1025
  %v1033 = vpack.c.bf16 %v1024, %v1023
  %v1034 = vpack.c.bf16 %v1030, %v1029
  %1035 = vrot.lane.b32.xlu0 %v908, 110
  %v1036 = vpop.permute.xlu0 %1035
  %1037 = vrot.lane.b32.xlu0 %v912, 110
  %v1038 = vpop.permute.xlu0 %1037
  %1039 = vrot.lane.b32.xlu0 %v909, 110
  %v1040 = vpop.permute.xlu0 %1039
  %1041 = vrot.lane.b32.xlu0 %v913, 110
  %v1042 = vpop.permute.xlu0 %1041
  %1043 = vrot.lane.b32.xlu0 %v910, 110
  %v1044 = vpop.permute.xlu0 %1043
  %1045 = vrot.lane.b32.xlu0 %v914, 110
  %v1046 = vpop.permute.xlu0 %1045
  %1047 = vrot.lane.b32.xlu0 %v911, 110
  %v1048 = vpop.permute.xlu0 %1047
  %1049 = vrot.lane.b32.xlu0 %v915, 110
  %v1050 = vpop.permute.xlu0 %1049
  %v1051 = vsel %vm143, %v1044, %v1048
  %v1052 = vsel %vm143, %v1046, %v1050
  %v1053 = vsel %vm143, %v1040, %v1044
  %v1054 = vsel %vm143, %v1042, %v1046
  %v1055 = vsel %vm143, %v1036, %v1040
  %v1056 = vsel %vm143, %v1038, %v1042
  %v1057 = vsel %vm143, %v1048, %v1036
  %v1058 = vsel %vm143, %v1050, %v1038
  %v1059 = vpack.c.bf16 %v1056, %v1055
  %v1060 = vpack.c.bf16 %v1054, %v1053
  %v1061 = vpack.c.bf16 %v1052, %v1051
  %v1062 = vpack.c.bf16 %v1058, %v1057
  %1063 = vrot.lane.b32.xlu0 %v908, 96
  %v1064 = vpop.permute.xlu0 %1063
  %1065 = vrot.lane.b32.xlu0 %v912, 96
  %v1066 = vpop.permute.xlu0 %1065
  %1067 = vrot.lane.b32.xlu0 %v909, 96
  %v1068 = vpop.permute.xlu0 %1067
  %1069 = vrot.lane.b32.xlu0 %v913, 96
  %v1070 = vpop.permute.xlu0 %1069
  %1071 = vrot.lane.b32.xlu0 %v910, 96
  %v1072 = vpop.permute.xlu0 %1071
  %1073 = vrot.lane.b32.xlu0 %v914, 96
  %v1074 = vpop.permute.xlu0 %1073
  %1075 = vrot.lane.b32.xlu0 %v911, 96
  %v1076 = vpop.permute.xlu0 %1075
  %1077 = vrot.lane.b32.xlu0 %v915, 96
  %v1078 = vpop.permute.xlu0 %1077
  %v1079 = vsel %vm162, %v1072, %v1076
  %v1080 = vsel %vm162, %v1074, %v1078
  %v1081 = vsel %vm162, %v1068, %v1072
  %v1082 = vsel %vm162, %v1070, %v1074
  %v1083 = vsel %vm162, %v1064, %v1068
  %v1084 = vsel %vm162, %v1066, %v1070
  %v1085 = vsel %vm162, %v1076, %v1064
  %v1086 = vsel %vm162, %v1078, %v1066
  %v1087 = vpack.c.bf16 %v1084, %v1083
  %v1088 = vpack.c.bf16 %v1082, %v1081
  %v1089 = vpack.c.bf16 %v1080, %v1079
  %v1090 = vpack.c.bf16 %v1086, %v1085
  %1091 = vrot.lane.b32.xlu0 %v908, 95
  %v1092 = vpop.permute.xlu0 %1091
  %1093 = vrot.lane.b32.xlu0 %v912, 95
  %v1094 = vpop.permute.xlu0 %1093
  %1095 = vrot.lane.b32.xlu0 %v909, 95
  %v1096 = vpop.permute.xlu0 %1095
  %1097 = vrot.lane.b32.xlu0 %v913, 95
  %v1098 = vpop.permute.xlu0 %1097
  %1099 = vrot.lane.b32.xlu0 %v910, 95
  %v1100 = vpop.permute.xlu0 %1099
  %1101 = vrot.lane.b32.xlu0 %v914, 95
  %v1102 = vpop.permute.xlu0 %1101
  %1103 = vrot.lane.b32.xlu0 %v911, 95
  %v1104 = vpop.permute.xlu0 %1103
  %1105 = vrot.lane.b32.xlu0 %v915, 95
  %v1106 = vpop.permute.xlu0 %1105
  %v1107 = vsel %vm181, %v1100, %v1104
  %v1108 = vsel %vm181, %v1102, %v1106
  %v1109 = vsel %vm181, %v1096, %v1100
  %v1110 = vsel %vm181, %v1098, %v1102
  %v1111 = vsel %vm181, %v1092, %v1096
  %v1112 = vsel %vm181, %v1094, %v1098
  %v1113 = vsel %vm181, %v1104, %v1092
  %v1114 = vsel %vm181, %v1106, %v1094
  %v1115 = vpack.c.bf16 %v1112, %v1111
  %v1116 = vpack.c.bf16 %v1110, %v1109
  %v1117 = vpack.c.bf16 %v1108, %v1107
  %v1118 = vpack.c.bf16 %v1114, %v1113
  %1119 = vrot.lane.b32.xlu0 %v908, 94
  %v1120 = vpop.permute.xlu0 %1119
  %1121 = vrot.lane.b32.xlu0 %v912, 94
  %v1122 = vpop.permute.xlu0 %1121
  %1123 = vrot.lane.b32.xlu0 %v909, 94
  %v1124 = vpop.permute.xlu0 %1123
  %1125 = vrot.lane.b32.xlu0 %v913, 94
  %v1126 = vpop.permute.xlu0 %1125
  %1127 = vrot.lane.b32.xlu0 %v910, 94
  %v1128 = vpop.permute.xlu0 %1127
  %1129 = vrot.lane.b32.xlu0 %v914, 94
  %v1130 = vpop.permute.xlu0 %1129
  %1131 = vrot.lane.b32.xlu0 %v911, 94
  %v1132 = vpop.permute.xlu0 %1131
  %1133 = vrot.lane.b32.xlu0 %v915, 94
  %v1134 = vpop.permute.xlu0 %1133
  %v1135 = vsel %vm200, %v1128, %v1132
  %v1136 = vsel %vm200, %v1130, %v1134
  %v1137 = vsel %vm200, %v1124, %v1128
  %v1138 = vsel %vm200, %v1126, %v1130
  %v1139 = vsel %vm200, %v1120, %v1124
  %v1140 = vsel %vm200, %v1122, %v1126
  %v1141 = vsel %vm200, %v1132, %v1120
  %v1142 = vsel %vm200, %v1134, %v1122
  %v1143 = vpack.c.bf16 %v1140, %v1139
  %v1144 = vpack.c.bf16 %v1138, %v1137
  %v1145 = vpack.c.bf16 %v1136, %v1135
  %v1146 = vpack.c.bf16 %v1142, %v1141
  %v1149 = vunpack.c.l.b16 %v917
  %v1150 = vunpack.c.h.b16 %v917
  %v1151 = vunpack.c.l.b16 %v918
  %v1152 = vunpack.c.h.b16 %v918
  %v1153 = vpack.c.b16 %v1151, %v1149
  %v1154 = vpack.c.b16 %v1152, %v1150
  %v1157 = vsel %vm218, %v1154, 0
  %1159 = vmatprep.subr.bf16.mxu0 %v920
  %1160 = vmatpush1.bf16.msra.mxu0 %v919
  %1161 = vmatprep.subr.bf16.mxu0 %v948
  %1162 = vmatpush1.bf16.msra.mxu0 %v947
  %1163 = vmatprep.subr.bf16.mxu0 %v976
  %1164 = vmatpush1.bf16.msra.mxu0 %v975
  %1165 = vmatprep.subr.bf16.mxu0 %v1004
  %1166 = vmatpush1.bf16.msra.mxu0 %v1003
  %1167 = vmatprep.subr.bf16.mxu0 %v1032
  %1168 = vmatpush1.bf16.msra.mxu0 %v1031
  %1169 = vmatprep.subr.bf16.mxu0 %v1060
  %1170 = vmatpush1.bf16.msra.mxu0 %v1059
  %1171 = vmatprep.subr.bf16.mxu0 %v1088
  %1172 = vmatpush1.bf16.msra.mxu0 %v1087
  %1173 = vmatprep.subr.bf16.mxu0 %v1116
  %1174 = vmatpush1.bf16.msra.mxu0 %v1115
  %1175 = vmatprep.subr.bf16.mxu0 %v1144
  %1176 = vmatpush1.bf16.msra.mxu0 %v1143
  %1177 = vmatprep.subr.bf16.mxu0 0
  %1178 = vmatpush1.bf16.msra.mxu0 0
  %1179 = vmatprep.subr.bf16.mxu0 0
  %1180 = vmatpush1.bf16.msra.mxu0 0
  %1181 = vmatprep.subr.bf16.mxu0 0
  %1182 = vmatpush1.bf16.msra.mxu0 0
  %1183 = vmatprep.subr.bf16.mxu0 0
  %1184 = vmatpush1.bf16.msra.mxu0 0
  %1185 = vmatprep.subr.bf16.mxu0 0
  %1186 = vmatpush1.bf16.msra.mxu0 0
  %1187 = vmatprep.subr.bf16.mxu0 0
  %1188 = vmatpush1.bf16.msra.mxu0 0
  %1189 = vmatprep.subr.bf16.mxu0 0
  %1190 = vmatpush1.bf16.msra.mxu0 0
  %1191 = vmatprep.mubr.bf16.mxu0 %v1157
  %1192 = vmatmul.mubr.bf16.gmra.mrb[0].mxu0 %v1153
  %v1193 = vpop.f32.mrb[0].mxu0
  %v1194 = vadd.f32 0.0, %v1193
  %v1195 = vpop.f32.mrb[0].mxu0
  %v1196 = vadd.f32 0.0, %v1195
  %v1197 = vpop.f32.mrb[0].mxu0
  %v1198 = vadd.f32 0.0, %v1197
  %v1199 = vpop.f32.mrb[0].mxu0
  %v1200 = vadd.f32 0.0, %v1199
  %1201 = vdwg.mxu0
  %1202 = vmatprep.subr.bf16.mxu0 %v922
  %1203 = vmatpush1.bf16.msra.mxu0 %v921
  %1204 = vmatprep.subr.bf16.mxu0 %v950
  %1205 = vmatpush1.bf16.msra.mxu0 %v949
  %1206 = vmatprep.subr.bf16.mxu0 %v978
  %1207 = vmatpush1.bf16.msra.mxu0 %v977
  %1208 = vmatprep.subr.bf16.mxu0 %v1006
  %1209 = vmatpush1.bf16.msra.mxu0 %v1005
  %1210 = vmatprep.subr.bf16.mxu0 %v1034
  %1211 = vmatpush1.bf16.msra.mxu0 %v1033
  %1212 = vmatprep.subr.bf16.mxu0 %v1062
  %1213 = vmatpush1.bf16.msra.mxu0 %v1061
  %1214 = vmatprep.subr.bf16.mxu0 %v1090
  %1215 = vmatpush1.bf16.msra.mxu0 %v1089
  %1216 = vmatprep.subr.bf16.mxu0 %v1118
  %1217 = vmatpush1.bf16.msra.mxu0 %v1117
  %1218 = vmatprep.subr.bf16.mxu0 %v1146
  %1219 = vmatpush1.bf16.msra.mxu0 %v1145
  %1220 = vmatprep.subr.bf16.mxu0 0
  %1221 = vmatpush1.bf16.msra.mxu0 0
  %1222 = vmatprep.subr.bf16.mxu0 0
  %1223 = vmatpush1.bf16.msra.mxu0 0
  %1224 = vmatprep.subr.bf16.mxu0 0
  %1225 = vmatpush1.bf16.msra.mxu0 0
  %1226 = vmatprep.subr.bf16.mxu0 0
  %1227 = vmatpush1.bf16.msra.mxu0 0
  %1228 = vmatprep.subr.bf16.mxu0 0
  %1229 = vmatpush1.bf16.msra.mxu0 0
  %1230 = vmatprep.subr.bf16.mxu0 0
  %1231 = vmatpush1.bf16.msra.mxu0 0
  %1232 = vmatprep.subr.bf16.mxu0 0
  %1233 = vmatpush1.bf16.msra.mxu0 0
  %1234 = vmatprep.mubr.bf16.mxu0 %v1157
  %1235 = vmatmul.mubr.bf16.gmra.mrb[0].mxu0 %v1153
  %v1236 = vpop.f32.mrb[0].mxu0
  %v1237 = vadd.f32 0.0, %v1236
  %v1238 = vpop.f32.mrb[0].mxu0
  %v1239 = vadd.f32 0.0, %v1238
  %v1240 = vpop.f32.mrb[0].mxu0
  %v1241 = vadd.f32 0.0, %v1240
  %v1242 = vpop.f32.mrb[0].mxu0
  %v1243 = vadd.f32 0.0, %v1242
  %1244 = vdwg.mxu0
  %s1245 = scalar_lea.vmem %s3, 64
  %v1246 = vld [vmem:[%s1245] sm:$0xff]
  %v1247 = vld [vmem:[%s1245 + $0x8] sm:$0xff]
  %s1248 = scalar_lea.vmem %s3, 80
  %v1249 = vld [vmem:[%s1248] sm:$0xff]
  %v1250 = vld [vmem:[%s1248 + $0x8] sm:$0xff]
  %vm1251 = vcmp.lt.s32.totalorder %v34, 10
  %vm1252 = vcmp.lt.s32.totalorder %v35, 10
  %vm1253 = vcmp.lt.s32.totalorder %v36, 10
  %vm1254 = vcmp.lt.s32.totalorder %v37, 10
  %vm1255 = vcmp.lt.s32.totalorder %v26, 10
  %vm1256 = vcmp.lt.s32.totalorder %v27, 10
  %vm1257 = vcmp.lt.s32.totalorder %v28, 10
  %vm1258 = vcmp.lt.s32.totalorder %v29, 10
  %vm1259 = vmand %vm1251, %vm1255
  %vm1260 = vmand %vm1252, %vm1256
  %vm1261 = vmand %vm1253, %vm1257
  %vm1262 = vmand %vm1254, %vm1258
  %v1263 = vsel %vm1259, 1, 0
  %v1264 = vsel %vm1260, 1, 0
  %v1265 = vsel %vm1261, 1, 0
  %v1266 = vsel %vm1262, 1, 0
  %v1267 = vcvt.s32.f32 %v1263
  %v1268 = vcvt.s32.f32 %v1264
  %v1269 = vcvt.s32.f32 %v1265
  %v1270 = vcvt.s32.f32 %v1266
  %v1271 = vmul.f32 %v1194, %v1267
  %v1272 = vmul.f32 %v1196, %v1268
  %v1273 = vmul.f32 %v1237, %v1269
  %v1274 = vmul.f32 %v1239, %v1270
  %v1275 = vmul.f32 %v1198, %v1267
  %v1276 = vmul.f32 %v1200, %v1268
  %v1277 = vmul.f32 %v1241, %v1269
  %v1278 = vmul.f32 %v1243, %v1270
  %v1279 = vmul.f32 %v1271, %v1271
  %v1280 = vmul.f32 %v1272, %v1272
  %v1281 = vmul.f32 %v1273, %v1273
  %v1282 = vmul.f32 %v1274, %v1274
  %v1283 = vmul.f32 %v1275, %v1275
  %v1284 = vmul.f32 %v1276, %v1276
  %v1285 = vmul.f32 %v1277, %v1277
  %v1286 = vmul.f32 %v1278, %v1278
  %v1287 = vadd.f32 %v1271, %v1272
  %v1288 = vadd.f32 %v1287, %v1273
  %v1289 = vadd.f32 %v1288, %v1274
  %1290 = vadd.xlane.f32.xlu0 %v1289
  %v1291 = vpop.xlane.xlu0 %1290
  %v1292 = vadd.f32 %v1275, %v1276
  %v1293 = vadd.f32 %v1292, %v1277
  %v1294 = vadd.f32 %v1293, %v1278
  %1295 = vadd.xlane.f32.xlu0 %v1294
  %v1296 = vpop.xlane.xlu0 %1295
  %v1297 = vadd.f32 %v1279, %v1280
  %v1298 = vadd.f32 %v1297, %v1281
  %v1299 = vadd.f32 %v1298, %v1282
  %1300 = vadd.xlane.f32.xlu0 %v1299
  %v1301 = vpop.xlane.xlu0 %1300
  %v1302 = vadd.f32 %v1283, %v1284
  %v1303 = vadd.f32 %v1302, %v1285
  %v1304 = vadd.f32 %v1303, %v1286
  %1305 = vadd.xlane.f32.xlu0 %v1304
  %v1306 = vpop.xlane.xlu0 %1305
  %v1307 = vmul.f32 %v1291, 0.005
  %v1308 = vmul.f32 %v1296, 0.005
  %v1309 = vmul.f32 %v1301, 0.005
  %v1310 = vmul.f32 %v1306, 0.005
  %v1311 = vmul.f32 %v1307, %v1307
  %v1312 = vmul.f32 %v1308, %v1308
  %v1313 = vsub.f32 %v1309, %v1311
  %v1314 = vsub.f32 %v1310, %v1312
  %v1315 = vadd.f32 %v1313, 1e-05
  %v1316 = vadd.f32 %v1314, 1e-05
  %v1317 = vrsqrt.pop %v1315
  %v1318 = vrsqrt.pop %v1316
  %v1319 = vmul.f32 %v1246, %v1317
  %v1320 = vmul.f32 %v1247, %v1318
  %v1321 = vmul.f32 %v1307, %v1319
  %v1322 = vmul.f32 %v1308, %v1320
  %v1323 = vsub.f32 %v1249, %v1321
  %v1324 = vsub.f32 %v1250, %v1322
  %1326 = vset.pattern.permute.xlu0 0
  %1327 = vperm.xlu0 %1326, %v1319
  %v1328 = vpop.permute.xlu0 %1327
  %1331 = vset.pattern.permute.xlu0 0
  %1332 = vperm.xlu0 %1331, %v1320
  %v1333 = vpop.permute.xlu0 %1332
  %v1335 = vmul.f32 %v1194, %v1328
  %v1336 = vmul.f32 %v1196, %v1328
  %v1337 = vmul.f32 %v1237, %v1328
  %v1338 = vmul.f32 %v1239, %v1328
  %v1339 = vmul.f32 %v1198, %v1333
  %v1340 = vmul.f32 %v1200, %v1333
  %v1341 = vmul.f32 %v1241, %v1333
  %v1342 = vmul.f32 %v1243, %v1333
  %1344 = vset.pattern.permute.xlu0 0
  %1345 = vperm.xlu0 %1344, %v1323
  %v1346 = vpop.permute.xlu0 %1345
  %1349 = vset.pattern.permute.xlu0 0
  %1350 = vperm.xlu0 %1349, %v1324
  %v1351 = vpop.permute.xlu0 %1350
  %v1353 = vadd.f32 %v1335, %v1346
  %v1354 = vadd.f32 %v1336, %v1346
  %v1355 = vadd.f32 %v1337, %v1346
  %v1356 = vadd.f32 %v1338, %v1346
  %v1357 = vadd.f32 %v1339, %v1351
  %v1358 = vadd.f32 %v1340, %v1351
  %v1359 = vadd.f32 %v1341, %v1351
  %v1360 = vadd.f32 %v1342, %v1351
  %vm1361 = vcmp.ge.f32.partialorder %v1353, 0.0
  %vm1362 = vcmp.ge.f32.partialorder %v1354, 0.0
  %vm1363 = vcmp.ge.f32.partialorder %v1355, 0.0
  %vm1364 = vcmp.ge.f32.partialorder %v1356, 0.0
  %vm1365 = vcmp.ge.f32.partialorder %v1357, 0.0
  %vm1366 = vcmp.ge.f32.partialorder %v1358, 0.0
  %vm1367 = vcmp.ge.f32.partialorder %v1359, 0.0
  %vm1368 = vcmp.ge.f32.partialorder %v1360, 0.0
  %v1369 = vmul.f32 %v1353, 0.2
  %v1370 = vmul.f32 %v1354, 0.2
  %v1371 = vmul.f32 %v1355, 0.2
  %v1372 = vmul.f32 %v1356, 0.2
  %v1373 = vmul.f32 %v1357, 0.2
  %v1374 = vmul.f32 %v1358, 0.2
  %v1375 = vmul.f32 %v1359, 0.2
  %v1376 = vmul.f32 %v1360, 0.2
  %v1377 = vsel %vm1361, %v1353, %v1369
  %v1378 = vsel %vm1362, %v1354, %v1370
  %v1379 = vsel %vm1363, %v1355, %v1371
  %v1380 = vsel %vm1364, %v1356, %v1372
  %v1381 = vsel %vm1365, %v1357, %v1373
  %v1382 = vsel %vm1366, %v1358, %v1374
  %v1383 = vsel %vm1367, %v1359, %v1375
  %v1384 = vsel %vm1368, %v1360, %v1376
  %s1385 = scalar_lea.vmem %s2, 48
  %v1386 = vld [vmem:[%s1385] sm:$0xff]
  %v1387 = vld [vmem:[%s1385 + $0x8] sm:$0xff]
  %v1388 = vpack.c.bf16 %v1381, %v1377
  %v1389 = vpack.c.bf16 %v1382, %v1378
  %v1390 = vpack.c.bf16 %v1383, %v1379
  %v1391 = vpack.c.bf16 %v1384, %v1380
  %1392 = vrot.lane.b32.xlu0 %v1377, 127
  %v1393 = vpop.permute.xlu0 %1392
  %1394 = vrot.lane.b32.xlu0 %v1381, 127
  %v1395 = vpop.permute.xlu0 %1394
  %1396 = vrot.lane.b32.xlu0 %v1378, 127
  %v1397 = vpop.permute.xlu0 %1396
  %1398 = vrot.lane.b32.xlu0 %v1382, 127
  %v1399 = vpop.permute.xlu0 %1398
  %1400 = vrot.lane.b32.xlu0 %v1379, 127
  %v1401 = vpop.permute.xlu0 %1400
  %1402 = vrot.lane.b32.xlu0 %v1383, 127
  %v1403 = vpop.permute.xlu0 %1402
  %1404 = vrot.lane.b32.xlu0 %v1380, 127
  %v1405 = vpop.permute.xlu0 %1404
  %1406 = vrot.lane.b32.xlu0 %v1384, 127
  %v1407 = vpop.permute.xlu0 %1406
  %v1408 = vsel %vm67, %v1401, %v1405
  %v1409 = vsel %vm67, %v1403, %v1407
  %v1410 = vsel %vm67, %v1397, %v1401
  %v1411 = vsel %vm67, %v1399, %v1403
  %v1412 = vsel %vm67, %v1393, %v1397
  %v1413 = vsel %vm67, %v1395, %v1399
  %v1414 = vsel %vm67, %v1405, %v1393
  %v1415 = vsel %vm67, %v1407, %v1395
  %v1416 = vpack.c.bf16 %v1413, %v1412
  %v1417 = vpack.c.bf16 %v1411, %v1410
  %v1418 = vpack.c.bf16 %v1409, %v1408
  %v1419 = vpack.c.bf16 %v1415, %v1414
  %1420 = vrot.lane.b32.xlu0 %v1377, 126
  %v1421 = vpop.permute.xlu0 %1420
  %1422 = vrot.lane.b32.xlu0 %v1381, 126
  %v1423 = vpop.permute.xlu0 %1422
  %1424 = vrot.lane.b32.xlu0 %v1378, 126
  %v1425 = vpop.permute.xlu0 %1424
  %1426 = vrot.lane.b32.xlu0 %v1382, 126
  %v1427 = vpop.permute.xlu0 %1426
  %1428 = vrot.lane.b32.xlu0 %v1379, 126
  %v1429 = vpop.permute.xlu0 %1428
  %1430 = vrot.lane.b32.xlu0 %v1383, 126
  %v1431 = vpop.permute.xlu0 %1430
  %1432 = vrot.lane.b32.xlu0 %v1380, 126
  %v1433 = vpop.permute.xlu0 %1432
  %1434 = vrot.lane.b32.xlu0 %v1384, 126
  %v1435 = vpop.permute.xlu0 %1434
  %v1436 = vsel %vm86, %v1429, %v1433
  %v1437 = vsel %vm86, %v1431, %v1435
  %v1438 = vsel %vm86, %v1425, %v1429
  %v1439 = vsel %vm86, %v1427, %v1431
  %v1440 = vsel %vm86, %v1421, %v1425
  %v1441 = vsel %vm86, %v1423, %v1427
  %v1442 = vsel %vm86, %v1433, %v1421
  %v1443 = vsel %vm86, %v1435, %v1423
  %v1444 = vpack.c.bf16 %v1441, %v1440
  %v1445 = vpack.c.bf16 %v1439, %v1438
  %v1446 = vpack.c.bf16 %v1437, %v1436
  %v1447 = vpack.c.bf16 %v1443, %v1442
  %1448 = vrot.lane.b32.xlu0 %v1377, 112
  %v1449 = vpop.permute.xlu0 %1448
  %1450 = vrot.lane.b32.xlu0 %v1381, 112
  %v1451 = vpop.permute.xlu0 %1450
  %1452 = vrot.lane.b32.xlu0 %v1378, 112
  %v1453 = vpop.permute.xlu0 %1452
  %1454 = vrot.lane.b32.xlu0 %v1382, 112
  %v1455 = vpop.permute.xlu0 %1454
  %1456 = vrot.lane.b32.xlu0 %v1379, 112
  %v1457 = vpop.permute.xlu0 %1456
  %1458 = vrot.lane.b32.xlu0 %v1383, 112
  %v1459 = vpop.permute.xlu0 %1458
  %1460 = vrot.lane.b32.xlu0 %v1380, 112
  %v1461 = vpop.permute.xlu0 %1460
  %1462 = vrot.lane.b32.xlu0 %v1384, 112
  %v1463 = vpop.permute.xlu0 %1462
  %v1464 = vsel %vm105, %v1457, %v1461
  %v1465 = vsel %vm105, %v1459, %v1463
  %v1466 = vsel %vm105, %v1453, %v1457
  %v1467 = vsel %vm105, %v1455, %v1459
  %v1468 = vsel %vm105, %v1449, %v1453
  %v1469 = vsel %vm105, %v1451, %v1455
  %v1470 = vsel %vm105, %v1461, %v1449
  %v1471 = vsel %vm105, %v1463, %v1451
  %v1472 = vpack.c.bf16 %v1469, %v1468
  %v1473 = vpack.c.bf16 %v1467, %v1466
  %v1474 = vpack.c.bf16 %v1465, %v1464
  %v1475 = vpack.c.bf16 %v1471, %v1470
  %1476 = vrot.lane.b32.xlu0 %v1377, 111
  %v1477 = vpop.permute.xlu0 %1476
  %1478 = vrot.lane.b32.xlu0 %v1381, 111
  %v1479 = vpop.permute.xlu0 %1478
  %1480 = vrot.lane.b32.xlu0 %v1378, 111
  %v1481 = vpop.permute.xlu0 %1480
  %1482 = vrot.lane.b32.xlu0 %v1382, 111
  %v1483 = vpop.permute.xlu0 %1482
  %1484 = vrot.lane.b32.xlu0 %v1379, 111
  %v1485 = vpop.permute.xlu0 %1484
  %1486 = vrot.lane.b32.xlu0 %v1383, 111
  %v1487 = vpop.permute.xlu0 %1486
  %1488 = vrot.lane.b32.xlu0 %v1380, 111
  %v1489 = vpop.permute.xlu0 %1488
  %1490 = vrot.lane.b32.xlu0 %v1384, 111
  %v1491 = vpop.permute.xlu0 %1490
  %v1492 = vsel %vm124, %v1485, %v1489
  %v1493 = vsel %vm124, %v1487, %v1491
  %v1494 = vsel %vm124, %v1481, %v1485
  %v1495 = vsel %vm124, %v1483, %v1487
  %v1496 = vsel %vm124, %v1477, %v1481
  %v1497 = vsel %vm124, %v1479, %v1483
  %v1498 = vsel %vm124, %v1489, %v1477
  %v1499 = vsel %vm124, %v1491, %v1479
  %v1500 = vpack.c.bf16 %v1497, %v1496
  %v1501 = vpack.c.bf16 %v1495, %v1494
  %v1502 = vpack.c.bf16 %v1493, %v1492
  %v1503 = vpack.c.bf16 %v1499, %v1498
  %1504 = vrot.lane.b32.xlu0 %v1377, 110
  %v1505 = vpop.permute.xlu0 %1504
  %1506 = vrot.lane.b32.xlu0 %v1381, 110
  %v1507 = vpop.permute.xlu0 %1506
  %1508 = vrot.lane.b32.xlu0 %v1378, 110
  %v1509 = vpop.permute.xlu0 %1508
  %1510 = vrot.lane.b32.xlu0 %v1382, 110
  %v1511 = vpop.permute.xlu0 %1510
  %1512 = vrot.lane.b32.xlu0 %v1379, 110
  %v1513 = vpop.permute.xlu0 %1512
  %1514 = vrot.lane.b32.xlu0 %v1383, 110
  %v1515 = vpop.permute.xlu0 %1514
  %1516 = vrot.lane.b32.xlu0 %v1380, 110
  %v1517 = vpop.permute.xlu0 %1516
  %1518 = vrot.lane.b32.xlu0 %v1384, 110
  %v1519 = vpop.permute.xlu0 %1518
  %v1520 = vsel %vm143, %v1513, %v1517
  %v1521 = vsel %vm143, %v1515, %v1519
  %v1522 = vsel %vm143, %v1509, %v1513
  %v1523 = vsel %vm143, %v1511, %v1515
  %v1524 = vsel %vm143, %v1505, %v1509
  %v1525 = vsel %vm143, %v1507, %v1511
  %v1526 = vsel %vm143, %v1517, %v1505
  %v1527 = vsel %vm143, %v1519, %v1507
  %v1528 = vpack.c.bf16 %v1525, %v1524
  %v1529 = vpack.c.bf16 %v1523, %v1522
  %v1530 = vpack.c.bf16 %v1521, %v1520
  %v1531 = vpack.c.bf16 %v1527, %v1526
  %1532 = vrot.lane.b32.xlu0 %v1377, 96
  %v1533 = vpop.permute.xlu0 %1532
  %1534 = vrot.lane.b32.xlu0 %v1381, 96
  %v1535 = vpop.permute.xlu0 %1534
  %1536 = vrot.lane.b32.xlu0 %v1378, 96
  %v1537 = vpop.permute.xlu0 %1536
  %1538 = vrot.lane.b32.xlu0 %v1382, 96
  %v1539 = vpop.permute.xlu0 %1538
  %1540 = vrot.lane.b32.xlu0 %v1379, 96
  %v1541 = vpop.permute.xlu0 %1540
  %1542 = vrot.lane.b32.xlu0 %v1383, 96
  %v1543 = vpop.permute.xlu0 %1542
  %1544 = vrot.lane.b32.xlu0 %v1380, 96
  %v1545 = vpop.permute.xlu0 %1544
  %1546 = vrot.lane.b32.xlu0 %v1384, 96
  %v1547 = vpop.permute.xlu0 %1546
  %v1548 = vsel %vm162, %v1541, %v1545
  %v1549 = vsel %vm162, %v1543, %v1547
  %v1550 = vsel %vm162, %v1537, %v1541
  %v1551 = vsel %vm162, %v1539, %v1543
  %v1552 = vsel %vm162, %v1533, %v1537
  %v1553 = vsel %vm162, %v1535, %v1539
  %v1554 = vsel %vm162, %v1545, %v1533
  %v1555 = vsel %vm162, %v1547, %v1535
  %v1556 = vpack.c.bf16 %v1553, %v1552
  %v1557 = vpack.c.bf16 %v1551, %v1550
  %v1558 = vpack.c.bf16 %v1549, %v1548
  %v1559 = vpack.c.bf16 %v1555, %v1554
  %1560 = vrot.lane.b32.xlu0 %v1377, 95
  %v1561 = vpop.permute.xlu0 %1560
  %1562 = vrot.lane.b32.xlu0 %v1381, 95
  %v1563 = vpop.permute.xlu0 %1562
  %1564 = vrot.lane.b32.xlu0 %v1378, 95
  %v1565 = vpop.permute.xlu0 %1564
  %1566 = vrot.lane.b32.xlu0 %v1382, 95
  %v1567 = vpop.permute.xlu0 %1566
  %1568 = vrot.lane.b32.xlu0 %v1379, 95
  %v1569 = vpop.permute.xlu0 %1568
  %1570 = vrot.lane.b32.xlu0 %v1383, 95
  %v1571 = vpop.permute.xlu0 %1570
  %1572 = vrot.lane.b32.xlu0 %v1380, 95
  %v1573 = vpop.permute.xlu0 %1572
  %1574 = vrot.lane.b32.xlu0 %v1384, 95
  %v1575 = vpop.permute.xlu0 %1574
  %v1576 = vsel %vm181, %v1569, %v1573
  %v1577 = vsel %vm181, %v1571, %v1575
  %v1578 = vsel %vm181, %v1565, %v1569
  %v1579 = vsel %vm181, %v1567, %v1571
  %v1580 = vsel %vm181, %v1561, %v1565
  %v1581 = vsel %vm181, %v1563, %v1567
  %v1582 = vsel %vm181, %v1573, %v1561
  %v1583 = vsel %vm181, %v1575, %v1563
  %v1584 = vpack.c.bf16 %v1581, %v1580
  %v1585 = vpack.c.bf16 %v1579, %v1578
  %v1586 = vpack.c.bf16 %v1577, %v1576
  %v1587 = vpack.c.bf16 %v1583, %v1582
  %1588 = vrot.lane.b32.xlu0 %v1377, 94
  %v1589 = vpop.permute.xlu0 %1588
  %1590 = vrot.lane.b32.xlu0 %v1381, 94
  %v1591 = vpop.permute.xlu0 %1590
  %1592 = vrot.lane.b32.xlu0 %v1378, 94
  %v1593 = vpop.permute.xlu0 %1592
  %1594 = vrot.lane.b32.xlu0 %v1382, 94
  %v1595 = vpop.permute.xlu0 %1594
  %1596 = vrot.lane.b32.xlu0 %v1379, 94
  %v1597 = vpop.permute.xlu0 %1596
  %1598 = vrot.lane.b32.xlu0 %v1383, 94
  %v1599 = vpop.permute.xlu0 %1598
  %1600 = vrot.lane.b32.xlu0 %v1380, 94
  %v1601 = vpop.permute.xlu0 %1600
  %1602 = vrot.lane.b32.xlu0 %v1384, 94
  %v1603 = vpop.permute.xlu0 %1602
  %v1604 = vsel %vm200, %v1597, %v1601
  %v1605 = vsel %vm200, %v1599, %v1603
  %v1606 = vsel %vm200, %v1593, %v1597
  %v1607 = vsel %vm200, %v1595, %v1599
  %v1608 = vsel %vm200, %v1589, %v1593
  %v1609 = vsel %vm200, %v1591, %v1595
  %v1610 = vsel %vm200, %v1601, %v1589
  %v1611 = vsel %vm200, %v1603, %v1591
  %v1612 = vpack.c.bf16 %v1609, %v1608
  %v1613 = vpack.c.bf16 %v1607, %v1606
  %v1614 = vpack.c.bf16 %v1605, %v1604
  %v1615 = vpack.c.bf16 %v1611, %v1610
  %v1618 = vunpack.c.l.b16 %v1386
  %v1619 = vunpack.c.h.b16 %v1386
  %v1620 = vunpack.c.l.b16 %v1387
  %v1621 = vunpack.c.h.b16 %v1387
  %v1622 = vpack.c.b16 %v1620, %v1618
  %v1623 = vpack.c.b16 %v1621, %v1619
  %v1626 = vsel %vm218, %v1623, 0
  %1628 = vmatprep.subr.bf16.mxu0 %v1389
  %1629 = vmatpush1.bf16.msra.mxu0 %v1388
  %1630 = vmatprep.subr.bf16.mxu0 %v1417
  %1631 = vmatpush1.bf16.msra.mxu0 %v1416
  %1632 = vmatprep.subr.bf16.mxu0 %v1445
  %1633 = vmatpush1.bf16.msra.mxu0 %v1444
  %1634 = vmatprep.subr.bf16.mxu0 %v1473
  %1635 = vmatpush1.bf16.msra.mxu0 %v1472
  %1636 = vmatprep.subr.bf16.mxu0 %v1501
  %1637 = vmatpush1.bf16.msra.mxu0 %v1500
  %1638 = vmatprep.subr.bf16.mxu0 %v1529
  %1639 = vmatpush1.bf16.msra.mxu0 %v1528
  %1640 = vmatprep.subr.bf16.mxu0 %v1557
  %1641 = vmatpush1.bf16.msra.mxu0 %v1556
  %1642 = vmatprep.subr.bf16.mxu0 %v1585
  %1643 = vmatpush1.bf16.msra.mxu0 %v1584
  %1644 = vmatprep.subr.bf16.mxu0 %v1613
  %1645 = vmatpush1.bf16.msra.mxu0 %v1612
  %1646 = vmatprep.subr.bf16.mxu0 0
  %1647 = vmatpush1.bf16.msra.mxu0 0
  %1648 = vmatprep.subr.bf16.mxu0 0
  %1649 = vmatpush1.bf16.msra.mxu0 0
  %1650 = vmatprep.subr.bf16.mxu0 0
  %1651 = vmatpush1.bf16.msra.mxu0 0
  %1652 = vmatprep.subr.bf16.mxu0 0
  %1653 = vmatpush1.bf16.msra.mxu0 0
  %1654 = vmatprep.subr.bf16.mxu0 0
  %1655 = vmatpush1.bf16.msra.mxu0 0
  %1656 = vmatprep.subr.bf16.mxu0 0
  %1657 = vmatpush1.bf16.msra.mxu0 0
  %1658 = vmatprep.subr.bf16.mxu0 0
  %1659 = vmatpush1.bf16.msra.mxu0 0
  %1660 = vmatprep.mubr.bf16.mxu0 %v1626
  %1661 = vmatmul.mubr.bf16.gmra.mrb[0].mxu0 %v1622
  %v1662 = vpop.f32.mrb[0].mxu0
  %v1663 = vadd.f32 0.0, %v1662
  %v1664 = vpop.f32.mrb[0].mxu0
  %v1665 = vadd.f32 0.0, %v1664
  %v1666 = vpop.f32.mrb[0].mxu0
  %v1667 = vadd.f32 0.0, %v1666
  %v1668 = vpop.f32.mrb[0].mxu0
  %v1669 = vadd.f32 0.0, %v1668
  %1670 = vdwg.mxu0
  %1671 = vmatprep.subr.bf16.mxu0 %v1391
  %1672 = vmatpush1.bf16.msra.mxu0 %v1390
  %1673 = vmatprep.subr.bf16.mxu0 %v1419
  %1674 = vmatpush1.bf16.msra.mxu0 %v1418
  %1675 = vmatprep.subr.bf16.mxu0 %v1447
  %1676 = vmatpush1.bf16.msra.mxu0 %v1446
  %1677 = vmatprep.subr.bf16.mxu0 %v1475
  %1678 = vmatpush1.bf16.msra.mxu0 %v1474
  %1679 = vmatprep.subr.bf16.mxu0 %v1503
  %1680 = vmatpush1.bf16.msra.mxu0 %v1502
  %1681 = vmatprep.subr.bf16.mxu0 %v1531
  %1682 = vmatpush1.bf16.msra.mxu0 %v1530
  %1683 = vmatprep.subr.bf16.mxu0 %v1559
  %1684 = vmatpush1.bf16.msra.mxu0 %v1558
  %1685 = vmatprep.subr.bf16.mxu0 %v1587
  %1686 = vmatpush1.bf16.msra.mxu0 %v1586
  %1687 = vmatprep.subr.bf16.mxu0 %v1615
  %1688 = vmatpush1.bf16.msra.mxu0 %v1614
  %1689 = vmatprep.subr.bf16.mxu0 0
  %1690 = vmatpush1.bf16.msra.mxu0 0
  %1691 = vmatprep.subr.bf16.mxu0 0
  %1692 = vmatpush1.bf16.msra.mxu0 0
  %1693 = vmatprep.subr.bf16.mxu0 0
  %1694 = vmatpush1.bf16.msra.mxu0 0
  %1695 = vmatprep.subr.bf16.mxu0 0
  %1696 = vmatpush1.bf16.msra.mxu0 0
  %1697 = vmatprep.subr.bf16.mxu0 0
  %1698 = vmatpush1.bf16.msra.mxu0 0
  %1699 = vmatprep.subr.bf16.mxu0 0
  %1700 = vmatpush1.bf16.msra.mxu0 0
  %1701 = vmatprep.subr.bf16.mxu0 0
  %1702 = vmatpush1.bf16.msra.mxu0 0
  %1703 = vmatprep.mubr.bf16.mxu0 %v1626
  %1704 = vmatmul.mubr.bf16.gmra.mrb[0].mxu0 %v1622
  %v1705 = vpop.f32.mrb[0].mxu0
  %v1706 = vadd.f32 0.0, %v1705
  %v1707 = vpop.f32.mrb[0].mxu0
  %v1708 = vadd.f32 0.0, %v1707
  %v1709 = vpop.f32.mrb[0].mxu0
  %v1710 = vadd.f32 0.0, %v1709
  %v1711 = vpop.f32.mrb[0].mxu0
  %v1712 = vadd.f32 0.0, %v1711
  %1713 = vdwg.mxu0
  %s1714 = scalar_lea.vmem %s3, 96
  %v1715 = vld [vmem:[%s1714] sm:$0xff]
  %v1716 = vld [vmem:[%s1714 + $0x8] sm:$0xff]
  %s1717 = scalar_lea.vmem %s3, 112
  %v1718 = vld [vmem:[%s1717] sm:$0xff]
  %v1719 = vld [vmem:[%s1717 + $0x8] sm:$0xff]
  %vm1720 = vcmp.lt.s32.totalorder %v34, 8
  %vm1721 = vcmp.lt.s32.totalorder %v35, 8
  %vm1722 = vcmp.lt.s32.totalorder %v36, 8
  %vm1723 = vcmp.lt.s32.totalorder %v37, 8
  %vm1724 = vcmp.lt.s32.totalorder %v26, 8
  %vm1725 = vcmp.lt.s32.totalorder %v27, 8
  %vm1726 = vcmp.lt.s32.totalorder %v28, 8
  %vm1727 = vcmp.lt.s32.totalorder %v29, 8
  %vm1728 = vmand %vm1720, %vm1724
  %vm1729 = vmand %vm1721, %vm1725
  %vm1730 = vmand %vm1722, %vm1726
  %vm1731 = vmand %vm1723, %vm1727
  %v1732 = vsel %vm1728, 1, 0
  %v1733 = vsel %vm1729, 1, 0
  %v1734 = vsel %vm1730, 1, 0
  %v1735 = vsel %vm1731, 1, 0
  %v1736 = vcvt.s32.f32 %v1732
  %v1737 = vcvt.s32.f32 %v1733
  %v1738 = vcvt.s32.f32 %v1734
  %v1739 = vcvt.s32.f32 %v1735
  %v1740 = vmul.f32 %v1663, %v1736
  %v1741 = vmul.f32 %v1665, %v1737
  %v1742 = vmul.f32 %v1706, %v1738
  %v1743 = vmul.f32 %v1708, %v1739
  %v1744 = vmul.f32 %v1667, %v1736
  %v1745 = vmul.f32 %v1669, %v1737
  %v1746 = vmul.f32 %v1710, %v1738
  %v1747 = vmul.f32 %v1712, %v1739
  %v1748 = vmul.f32 %v1740, %v1740
  %v1749 = vmul.f32 %v1741, %v1741
  %v1750 = vmul.f32 %v1742, %v1742
  %v1751 = vmul.f32 %v1743, %v1743
  %v1752 = vmul.f32 %v1744, %v1744
  %v1753 = vmul.f32 %v1745, %v1745
  %v1754 = vmul.f32 %v1746, %v1746
  %v1755 = vmul.f32 %v1747, %v1747
  %v1756 = vadd.f32 %v1740, %v1741
  %v1757 = vadd.f32 %v1756, %v1742
  %v1758 = vadd.f32 %v1757, %v1743
  %1759 = vadd.xlane.f32.xlu0 %v1758
  %v1760 = vpop.xlane.xlu0 %1759
  %v1761 = vadd.f32 %v1744, %v1745
  %v1762 = vadd.f32 %v1761, %v1746
  %v1763 = vadd.f32 %v1762, %v1747
  %1764 = vadd.xlane.f32.xlu0 %v1763
  %v1765 = vpop.xlane.xlu0 %1764
  %v1766 = vadd.f32 %v1748, %v1749
  %v1767 = vadd.f32 %v1766, %v1750
  %v1768 = vadd.f32 %v1767, %v1751
  %1769 = vadd.xlane.f32.xlu0 %v1768
  %v1770 = vpop.xlane.xlu0 %1769
  %v1771 = vadd.f32 %v1752, %v1753
  %v1772 = vadd.f32 %v1771, %v1754
  %v1773 = vadd.f32 %v1772, %v1755
  %1774 = vadd.xlane.f32.xlu0 %v1773
  %v1775 = vpop.xlane.xlu0 %1774
  %v1776 = vmul.f32 %v1760, 0.0078125
  %v1777 = vmul.f32 %v1765, 0.0078125
  %v1778 = vmul.f32 %v1770, 0.0078125
  %v1779 = vmul.f32 %v1775, 0.0078125
  %v1780 = vmul.f32 %v1776, %v1776
  %v1781 = vmul.f32 %v1777, %v1777
  %v1782 = vsub.f32 %v1778, %v1780
  %v1783 = vsub.f32 %v1779, %v1781
  %v1784 = vadd.f32 %v1782, 1e-05
  %v1785 = vadd.f32 %v1783, 1e-05
  %v1786 = vrsqrt.pop %v1784
  %v1787 = vrsqrt.pop %v1785
  %v1788 = vmul.f32 %v1715, %v1786
  %v1789 = vmul.f32 %v1716, %v1787
  %v1790 = vmul.f32 %v1776, %v1788
  %v1791 = vmul.f32 %v1777, %v1789
  %v1792 = vsub.f32 %v1718, %v1790
  %v1793 = vsub.f32 %v1719, %v1791
  %1795 = vset.pattern.permute.xlu0 0
  %1796 = vperm.xlu0 %1795, %v1788
  %v1797 = vpop.permute.xlu0 %1796
  %1800 = vset.pattern.permute.xlu0 0
  %1801 = vperm.xlu0 %1800, %v1789
  %v1802 = vpop.permute.xlu0 %1801
  %v1804 = vmul.f32 %v1663, %v1797
  %v1805 = vmul.f32 %v1665, %v1797
  %v1806 = vmul.f32 %v1706, %v1797
  %v1807 = vmul.f32 %v1708, %v1797
  %v1808 = vmul.f32 %v1667, %v1802
  %v1809 = vmul.f32 %v1669, %v1802
  %v1810 = vmul.f32 %v1710, %v1802
  %v1811 = vmul.f32 %v1712, %v1802
  %1813 = vset.pattern.permute.xlu0 0
  %1814 = vperm.xlu0 %1813, %v1792
  %v1815 = vpop.permute.xlu0 %1814
  %1818 = vset.pattern.permute.xlu0 0
  %1819 = vperm.xlu0 %1818, %v1793
  %v1820 = vpop.permute.xlu0 %1819
  %v1822 = vadd.f32 %v1804, %v1815
  %v1823 = vadd.f32 %v1805, %v1815
  %v1824 = vadd.f32 %v1806, %v1815
  %v1825 = vadd.f32 %v1807, %v1815
  %v1826 = vadd.f32 %v1808, %v1820
  %v1827 = vadd.f32 %v1809, %v1820
  %v1828 = vadd.f32 %v1810, %v1820
  %v1829 = vadd.f32 %v1811, %v1820
  %vm1830 = vcmp.ge.f32.partialorder %v1822, 0.0
  %vm1831 = vcmp.ge.f32.partialorder %v1823, 0.0
  %vm1832 = vcmp.ge.f32.partialorder %v1824, 0.0
  %vm1833 = vcmp.ge.f32.partialorder %v1825, 0.0
  %vm1834 = vcmp.ge.f32.partialorder %v1826, 0.0
  %vm1835 = vcmp.ge.f32.partialorder %v1827, 0.0
  %vm1836 = vcmp.ge.f32.partialorder %v1828, 0.0
  %vm1837 = vcmp.ge.f32.partialorder %v1829, 0.0
  %v1838 = vmul.f32 %v1822, 0.2
  %v1839 = vmul.f32 %v1823, 0.2
  %v1840 = vmul.f32 %v1824, 0.2
  %v1841 = vmul.f32 %v1825, 0.2
  %v1842 = vmul.f32 %v1826, 0.2
  %v1843 = vmul.f32 %v1827, 0.2
  %v1844 = vmul.f32 %v1828, 0.2
  %v1845 = vmul.f32 %v1829, 0.2
  %v1846 = vsel %vm1830, %v1822, %v1838
  %v1847 = vsel %vm1831, %v1823, %v1839
  %v1848 = vsel %vm1832, %v1824, %v1840
  %v1849 = vsel %vm1833, %v1825, %v1841
  %v1850 = vsel %vm1834, %v1826, %v1842
  %v1851 = vsel %vm1835, %v1827, %v1843
  %v1852 = vsel %vm1836, %v1828, %v1844
  %v1853 = vsel %vm1837, %v1829, %v1845
  %s1854 = scalar_lea.vmem %s2, 64
  %v1855 = vld [vmem:[%s1854] sm:$0xff]
  %v1856 = vld [vmem:[%s1854 + $0x8] sm:$0xff]
  %v1857 = vpack.c.bf16 %v1850, %v1846
  %v1858 = vpack.c.bf16 %v1851, %v1847
  %v1859 = vpack.c.bf16 %v1852, %v1848
  %v1860 = vpack.c.bf16 %v1853, %v1849
  %1861 = vrot.lane.b32.xlu0 %v1846, 127
  %v1862 = vpop.permute.xlu0 %1861
  %1863 = vrot.lane.b32.xlu0 %v1850, 127
  %v1864 = vpop.permute.xlu0 %1863
  %1865 = vrot.lane.b32.xlu0 %v1847, 127
  %v1866 = vpop.permute.xlu0 %1865
  %1867 = vrot.lane.b32.xlu0 %v1851, 127
  %v1868 = vpop.permute.xlu0 %1867
  %1869 = vrot.lane.b32.xlu0 %v1848, 127
  %v1870 = vpop.permute.xlu0 %1869
  %1871 = vrot.lane.b32.xlu0 %v1852, 127
  %v1872 = vpop.permute.xlu0 %1871
  %1873 = vrot.lane.b32.xlu0 %v1849, 127
  %v1874 = vpop.permute.xlu0 %1873
  %1875 = vrot.lane.b32.xlu0 %v1853, 127
  %v1876 = vpop.permute.xlu0 %1875
  %v1877 = vsel %vm67, %v1870, %v1874
  %v1878 = vsel %vm67, %v1872, %v1876
  %v1879 = vsel %vm67, %v1866, %v1870
  %v1880 = vsel %vm67, %v1868, %v1872
  %v1881 = vsel %vm67, %v1862, %v1866
  %v1882 = vsel %vm67, %v1864, %v1868
  %v1883 = vsel %vm67, %v1874, %v1862
  %v1884 = vsel %vm67, %v1876, %v1864
  %v1885 = vpack.c.bf16 %v1882, %v1881
  %v1886 = vpack.c.bf16 %v1880, %v1879
  %v1887 = vpack.c.bf16 %v1878, %v1877
  %v1888 = vpack.c.bf16 %v1884, %v1883
  %1889 = vrot.lane.b32.xlu0 %v1846, 126
  %v1890 = vpop.permute.xlu0 %1889
  %1891 = vrot.lane.b32.xlu0 %v1850, 126
  %v1892 = vpop.permute.xlu0 %1891
  %1893 = vrot.lane.b32.xlu0 %v1847, 126
  %v1894 = vpop.permute.xlu0 %1893
  %1895 = vrot.lane.b32.xlu0 %v1851, 126
  %v1896 = vpop.permute.xlu0 %1895
  %1897 = vrot.lane.b32.xlu0 %v1848, 126
  %v1898 = vpop.permute.xlu0 %1897
  %1899 = vrot.lane.b32.xlu0 %v1852, 126
  %v1900 = vpop.permute.xlu0 %1899
  %1901 = vrot.lane.b32.xlu0 %v1849, 126
  %v1902 = vpop.permute.xlu0 %1901
  %1903 = vrot.lane.b32.xlu0 %v1853, 126
  %v1904 = vpop.permute.xlu0 %1903
  %v1905 = vsel %vm86, %v1898, %v1902
  %v1906 = vsel %vm86, %v1900, %v1904
  %v1907 = vsel %vm86, %v1894, %v1898
  %v1908 = vsel %vm86, %v1896, %v1900
  %v1909 = vsel %vm86, %v1890, %v1894
  %v1910 = vsel %vm86, %v1892, %v1896
  %v1911 = vsel %vm86, %v1902, %v1890
  %v1912 = vsel %vm86, %v1904, %v1892
  %v1913 = vpack.c.bf16 %v1910, %v1909
  %v1914 = vpack.c.bf16 %v1908, %v1907
  %v1915 = vpack.c.bf16 %v1906, %v1905
  %v1916 = vpack.c.bf16 %v1912, %v1911
  %1917 = vrot.lane.b32.xlu0 %v1846, 112
  %v1918 = vpop.permute.xlu0 %1917
  %1919 = vrot.lane.b32.xlu0 %v1850, 112
  %v1920 = vpop.permute.xlu0 %1919
  %1921 = vrot.lane.b32.xlu0 %v1847, 112
  %v1922 = vpop.permute.xlu0 %1921
  %1923 = vrot.lane.b32.xlu0 %v1851, 112
  %v1924 = vpop.permute.xlu0 %1923
  %1925 = vrot.lane.b32.xlu0 %v1848, 112
  %v1926 = vpop.permute.xlu0 %1925
  %1927 = vrot.lane.b32.xlu0 %v1852, 112
  %v1928 = vpop.permute.xlu0 %1927
  %1929 = vrot.lane.b32.xlu0 %v1849, 112
  %v1930 = vpop.permute.xlu0 %1929
  %1931 = vrot.lane.b32.xlu0 %v1853, 112
  %v1932 = vpop.permute.xlu0 %1931
  %v1933 = vsel %vm105, %v1926, %v1930
  %v1934 = vsel %vm105, %v1928, %v1932
  %v1935 = vsel %vm105, %v1922, %v1926
  %v1936 = vsel %vm105, %v1924, %v1928
  %v1937 = vsel %vm105, %v1918, %v1922
  %v1938 = vsel %vm105, %v1920, %v1924
  %v1939 = vsel %vm105, %v1930, %v1918
  %v1940 = vsel %vm105, %v1932, %v1920
  %v1941 = vpack.c.bf16 %v1938, %v1937
  %v1942 = vpack.c.bf16 %v1936, %v1935
  %v1943 = vpack.c.bf16 %v1934, %v1933
  %v1944 = vpack.c.bf16 %v1940, %v1939
  %1945 = vrot.lane.b32.xlu0 %v1846, 111
  %v1946 = vpop.permute.xlu0 %1945
  %1947 = vrot.lane.b32.xlu0 %v1850, 111
  %v1948 = vpop.permute.xlu0 %1947
  %1949 = vrot.lane.b32.xlu0 %v1847, 111
  %v1950 = vpop.permute.xlu0 %1949
  %1951 = vrot.lane.b32.xlu0 %v1851, 111
  %v1952 = vpop.permute.xlu0 %1951
  %1953 = vrot.lane.b32.xlu0 %v1848, 111
  %v1954 = vpop.permute.xlu0 %1953
  %1955 = vrot.lane.b32.xlu0 %v1852, 111
  %v1956 = vpop.permute.xlu0 %1955
  %1957 = vrot.lane.b32.xlu0 %v1849, 111
  %v1958 = vpop.permute.xlu0 %1957
  %1959 = vrot.lane.b32.xlu0 %v1853, 111
  %v1960 = vpop.permute.xlu0 %1959
  %v1961 = vsel %vm124, %v1954, %v1958
  %v1962 = vsel %vm124, %v1956, %v1960
  %v1963 = vsel %vm124, %v1950, %v1954
  %v1964 = vsel %vm124, %v1952, %v1956
  %v1965 = vsel %vm124, %v1946, %v1950
  %v1966 = vsel %vm124, %v1948, %v1952
  %v1967 = vsel %vm124, %v1958, %v1946
  %v1968 = vsel %vm124, %v1960, %v1948
  %v1969 = vpack.c.bf16 %v1966, %v1965
  %v1970 = vpack.c.bf16 %v1964, %v1963
  %v1971 = vpack.c.bf16 %v1962, %v1961
  %v1972 = vpack.c.bf16 %v1968, %v1967
  %1973 = vrot.lane.b32.xlu0 %v1846, 110
  %v1974 = vpop.permute.xlu0 %1973
  %1975 = vrot.lane.b32.xlu0 %v1850, 110
  %v1976 = vpop.permute.xlu0 %1975
  %1977 = vrot.lane.b32.xlu0 %v1847, 110
  %v1978 = vpop.permute.xlu0 %1977
  %1979 = vrot.lane.b32.xlu0 %v1851, 110
  %v1980 = vpop.permute.xlu0 %1979
  %1981 = vrot.lane.b32.xlu0 %v1848, 110
  %v1982 = vpop.permute.xlu0 %1981
  %1983 = vrot.lane.b32.xlu0 %v1852, 110
  %v1984 = vpop.permute.xlu0 %1983
  %1985 = vrot.lane.b32.xlu0 %v1849, 110
  %v1986 = vpop.permute.xlu0 %1985
  %1987 = vrot.lane.b32.xlu0 %v1853, 110
  %v1988 = vpop.permute.xlu0 %1987
  %v1989 = vsel %vm143, %v1982, %v1986
  %v1990 = vsel %vm143, %v1984, %v1988
  %v1991 = vsel %vm143, %v1978, %v1982
  %v1992 = vsel %vm143, %v1980, %v1984
  %v1993 = vsel %vm143, %v1974, %v1978
  %v1994 = vsel %vm143, %v1976, %v1980
  %v1995 = vsel %vm143, %v1986, %v1974
  %v1996 = vsel %vm143, %v1988, %v1976
  %v1997 = vpack.c.bf16 %v1994, %v1993
  %v1998 = vpack.c.bf16 %v1992, %v1991
  %v1999 = vpack.c.bf16 %v1990, %v1989
  %v2000 = vpack.c.bf16 %v1996, %v1995
  %2001 = vrot.lane.b32.xlu0 %v1846, 96
  %v2002 = vpop.permute.xlu0 %2001
  %2003 = vrot.lane.b32.xlu0 %v1850, 96
  %v2004 = vpop.permute.xlu0 %2003
  %2005 = vrot.lane.b32.xlu0 %v1847, 96
  %v2006 = vpop.permute.xlu0 %2005
  %2007 = vrot.lane.b32.xlu0 %v1851, 96
  %v2008 = vpop.permute.xlu0 %2007
  %2009 = vrot.lane.b32.xlu0 %v1848, 96
  %v2010 = vpop.permute.xlu0 %2009
  %2011 = vrot.lane.b32.xlu0 %v1852, 96
  %v2012 = vpop.permute.xlu0 %2011
  %2013 = vrot.lane.b32.xlu0 %v1849, 96
  %v2014 = vpop.permute.xlu0 %2013
  %2015 = vrot.lane.b32.xlu0 %v1853, 96
  %v2016 = vpop.permute.xlu0 %2015
  %v2017 = vsel %vm162, %v2010, %v2014
  %v2018 = vsel %vm162, %v2012, %v2016
  %v2019 = vsel %vm162, %v2006, %v2010
  %v2020 = vsel %vm162, %v2008, %v2012
  %v2021 = vsel %vm162, %v2002, %v2006
  %v2022 = vsel %vm162, %v2004, %v2008
  %v2023 = vsel %vm162, %v2014, %v2002
  %v2024 = vsel %vm162, %v2016, %v2004
  %v2025 = vpack.c.bf16 %v2022, %v2021
  %v2026 = vpack.c.bf16 %v2020, %v2019
  %v2027 = vpack.c.bf16 %v2018, %v2017
  %v2028 = vpack.c.bf16 %v2024, %v2023
  %2029 = vrot.lane.b32.xlu0 %v1846, 95
  %v2030 = vpop.permute.xlu0 %2029
  %2031 = vrot.lane.b32.xlu0 %v1850, 95
  %v2032 = vpop.permute.xlu0 %2031
  %2033 = vrot.lane.b32.xlu0 %v1847, 95
  %v2034 = vpop.permute.xlu0 %2033
  %2035 = vrot.lane.b32.xlu0 %v1851, 95
  %v2036 = vpop.permute.xlu0 %2035
  %2037 = vrot.lane.b32.xlu0 %v1848, 95
  %v2038 = vpop.permute.xlu0 %2037
  %2039 = vrot.lane.b32.xlu0 %v1852, 95
  %v2040 = vpop.permute.xlu0 %2039
  %2041 = vrot.lane.b32.xlu0 %v1849, 95
  %v2042 = vpop.permute.xlu0 %2041
  %2043 = vrot.lane.b32.xlu0 %v1853, 95
  %v2044 = vpop.permute.xlu0 %2043
  %v2045 = vsel %vm181, %v2038, %v2042
  %v2046 = vsel %vm181, %v2040, %v2044
  %v2047 = vsel %vm181, %v2034, %v2038
  %v2048 = vsel %vm181, %v2036, %v2040
  %v2049 = vsel %vm181, %v2030, %v2034
  %v2050 = vsel %vm181, %v2032, %v2036
  %v2051 = vsel %vm181, %v2042, %v2030
  %v2052 = vsel %vm181, %v2044, %v2032
  %v2053 = vpack.c.bf16 %v2050, %v2049
  %v2054 = vpack.c.bf16 %v2048, %v2047
  %v2055 = vpack.c.bf16 %v2046, %v2045
  %v2056 = vpack.c.bf16 %v2052, %v2051
  %2057 = vrot.lane.b32.xlu0 %v1846, 94
  %v2058 = vpop.permute.xlu0 %2057
  %2059 = vrot.lane.b32.xlu0 %v1850, 94
  %v2060 = vpop.permute.xlu0 %2059
  %2061 = vrot.lane.b32.xlu0 %v1847, 94
  %v2062 = vpop.permute.xlu0 %2061
  %2063 = vrot.lane.b32.xlu0 %v1851, 94
  %v2064 = vpop.permute.xlu0 %2063
  %2065 = vrot.lane.b32.xlu0 %v1848, 94
  %v2066 = vpop.permute.xlu0 %2065
  %2067 = vrot.lane.b32.xlu0 %v1852, 94
  %v2068 = vpop.permute.xlu0 %2067
  %2069 = vrot.lane.b32.xlu0 %v1849, 94
  %v2070 = vpop.permute.xlu0 %2069
  %2071 = vrot.lane.b32.xlu0 %v1853, 94
  %v2072 = vpop.permute.xlu0 %2071
  %v2073 = vsel %vm200, %v2066, %v2070
  %v2074 = vsel %vm200, %v2068, %v2072
  %v2075 = vsel %vm200, %v2062, %v2066
  %v2076 = vsel %vm200, %v2064, %v2068
  %v2077 = vsel %vm200, %v2058, %v2062
  %v2078 = vsel %vm200, %v2060, %v2064
  %v2079 = vsel %vm200, %v2070, %v2058
  %v2080 = vsel %vm200, %v2072, %v2060
  %v2081 = vpack.c.bf16 %v2078, %v2077
  %v2082 = vpack.c.bf16 %v2076, %v2075
  %v2083 = vpack.c.bf16 %v2074, %v2073
  %v2084 = vpack.c.bf16 %v2080, %v2079
  %v2087 = vunpack.c.l.b16 %v1855
  %v2088 = vunpack.c.h.b16 %v1855
  %v2089 = vunpack.c.l.b16 %v1856
  %v2090 = vunpack.c.h.b16 %v1856
  %v2091 = vpack.c.b16 %v2089, %v2087
  %v2092 = vpack.c.b16 %v2090, %v2088
  %v2095 = vsel %vm218, %v2092, 0
  %2097 = vmatprep.subr.bf16.mxu0 %v1858
  %2098 = vmatpush1.bf16.msra.mxu0 %v1857
  %2099 = vmatprep.subr.bf16.mxu0 %v1886
  %2100 = vmatpush1.bf16.msra.mxu0 %v1885
  %2101 = vmatprep.subr.bf16.mxu0 %v1914
  %2102 = vmatpush1.bf16.msra.mxu0 %v1913
  %2103 = vmatprep.subr.bf16.mxu0 %v1942
  %2104 = vmatpush1.bf16.msra.mxu0 %v1941
  %2105 = vmatprep.subr.bf16.mxu0 %v1970
  %2106 = vmatpush1.bf16.msra.mxu0 %v1969
  %2107 = vmatprep.subr.bf16.mxu0 %v1998
  %2108 = vmatpush1.bf16.msra.mxu0 %v1997
  %2109 = vmatprep.subr.bf16.mxu0 %v2026
  %2110 = vmatpush1.bf16.msra.mxu0 %v2025
  %2111 = vmatprep.subr.bf16.mxu0 %v2054
  %2112 = vmatpush1.bf16.msra.mxu0 %v2053
  %2113 = vmatprep.subr.bf16.mxu0 %v2082
  %2114 = vmatpush1.bf16.msra.mxu0 %v2081
  %2115 = vmatprep.subr.bf16.mxu0 0
  %2116 = vmatpush1.bf16.msra.mxu0 0
  %2117 = vmatprep.subr.bf16.mxu0 0
  %2118 = vmatpush1.bf16.msra.mxu0 0
  %2119 = vmatprep.subr.bf16.mxu0 0
  %2120 = vmatpush1.bf16.msra.mxu0 0
  %2121 = vmatprep.subr.bf16.mxu0 0
  %2122 = vmatpush1.bf16.msra.mxu0 0
  %2123 = vmatprep.subr.bf16.mxu0 0
  %2124 = vmatpush1.bf16.msra.mxu0 0
  %2125 = vmatprep.subr.bf16.mxu0 0
  %2126 = vmatpush1.bf16.msra.mxu0 0
  %2127 = vmatprep.subr.bf16.mxu0 0
  %2128 = vmatpush1.bf16.msra.mxu0 0
  %2129 = vmatprep.mubr.bf16.mxu0 %v2095
  %2130 = vmatmul.mubr.bf16.gmra.mrb[0].mxu0 %v2091
  %v2131 = vpop.f32.mrb[0].mxu0
  %v2132 = vadd.f32 0.0, %v2131
  %v2133 = vpop.f32.mrb[0].mxu0
  %v2134 = vadd.f32 0.0, %v2133
  %v2135 = vpop.f32.mrb[0].mxu0
  %v2136 = vpop.f32.mrb[0].mxu0
  %2137 = vdwg.mxu0
  %2138 = vmatprep.subr.bf16.mxu0 %v1860
  %2139 = vmatpush1.bf16.msra.mxu0 %v1859
  %2140 = vmatprep.subr.bf16.mxu0 %v1888
  %2141 = vmatpush1.bf16.msra.mxu0 %v1887
  %2142 = vmatprep.subr.bf16.mxu0 %v1916
  %2143 = vmatpush1.bf16.msra.mxu0 %v1915
  %2144 = vmatprep.subr.bf16.mxu0 %v1944
  %2145 = vmatpush1.bf16.msra.mxu0 %v1943
  %2146 = vmatprep.subr.bf16.mxu0 %v1972
  %2147 = vmatpush1.bf16.msra.mxu0 %v1971
  %2148 = vmatprep.subr.bf16.mxu0 %v2000
  %2149 = vmatpush1.bf16.msra.mxu0 %v1999
  %2150 = vmatprep.subr.bf16.mxu0 %v2028
  %2151 = vmatpush1.bf16.msra.mxu0 %v2027
  %2152 = vmatprep.subr.bf16.mxu0 %v2056
  %2153 = vmatpush1.bf16.msra.mxu0 %v2055
  %2154 = vmatprep.subr.bf16.mxu0 %v2084
  %2155 = vmatpush1.bf16.msra.mxu0 %v2083
  %2156 = vmatprep.subr.bf16.mxu0 0
  %2157 = vmatpush1.bf16.msra.mxu0 0
  %2158 = vmatprep.subr.bf16.mxu0 0
  %2159 = vmatpush1.bf16.msra.mxu0 0
  %2160 = vmatprep.subr.bf16.mxu0 0
  %2161 = vmatpush1.bf16.msra.mxu0 0
  %2162 = vmatprep.subr.bf16.mxu0 0
  %2163 = vmatpush1.bf16.msra.mxu0 0
  %2164 = vmatprep.subr.bf16.mxu0 0
  %2165 = vmatpush1.bf16.msra.mxu0 0
  %2166 = vmatprep.subr.bf16.mxu0 0
  %2167 = vmatpush1.bf16.msra.mxu0 0
  %2168 = vmatprep.subr.bf16.mxu0 0
  %2169 = vmatpush1.bf16.msra.mxu0 0
  %2170 = vmatprep.mubr.bf16.mxu0 %v2095
  %2171 = vmatmul.mubr.bf16.gmra.mrb[0].mxu0 %v2091
  %v2172 = vpop.f32.mrb[0].mxu0
  %v2173 = vadd.f32 0.0, %v2172
  %v2174 = vpop.f32.mrb[0].mxu0
  %v2175 = vadd.f32 0.0, %v2174
  %v2176 = vpop.f32.mrb[0].mxu0
  %v2177 = vpop.f32.mrb[0].mxu0
  %2178 = vdwg.mxu0
  %v2179 = vld [vmem:[%s4] sm:$0x7]
  %2181 = vset.pattern.permute.xlu0 0
  %2182 = vperm.xlu0 %2181, %v2179
  %v2183 = vpop.permute.xlu0 %2182
  %v2185 = vadd.f32 %v2132, %v2183
  %v2186 = vadd.f32 %v2134, %v2183
  %v2187 = vadd.f32 %v2173, %v2183
  %v2188 = vadd.f32 %v2175, %v2183
  %v2189 = vtanh.pop %v2185
  %v2190 = vtanh.pop %v2186
  %v2191 = vtanh.pop %v2187
  %v2192 = vtanh.pop %v2188
  %v2193 = vld [vmem:[%s1] sm:$0x3f]
  %v2194 = vld [vmem:[%s1 + $0x8] sm:$0x3f]
  %2195 = vrot.lane.b32.xlu0 %v2193, 43
  %v2196 = vpop.permute.xlu0 %2195
  %2197 = vrot.lane.b32.xlu0 %v2194, 43
  %v2198 = vpop.permute.xlu0 %2197
  %vm2199 = vcmp.lt.s32.totalorder %v22, 43
  %v2200 = vsel %vm2199, %v2196, %v2198
  %v2201 = vsel %vm2199, %v2198, %v2196
  %v2202 = vadd.f32 %v2189, %v2200
  %v2203 = vadd.f32 %v2190, %v2201
  %v2206 = vrot.slane %v2200, 3
  %v2207 = vrot.slane %v2201, 3
  %v2210 = vadd.f32 %v2191, %v2206
  %v2211 = vadd.f32 %v2192, %v2207
  %v2214 = vrot.slane %v2210, 5
  %v2215 = vrot.slane %v2211, 5
  %v2218 = vsel %vm46, %v2202, %v2214
  %v2219 = vsel %vm46, %v2203, %v2215
  %2220 = vst [vmem:[%s5] sm:$0x3f] %v2218
  %2221 = vst [vmem:[%s5 + $0x8] sm:$0x3f] %v2219
  // Predicated region
  $region22: #{generator_forward.1} parent=0 // pred_check
    _
  $region23: #{generator_forward.1} parent=0 // pred_check_branch
    %2223 = sbr.rel (0) target = $region25
  $region24: #{generator_forward.1} parent=0 // pred_region
    _
  $region25: #{generator_forward.1} parent=0 // pred_fallthru
    _
  // Predicated region
  $region26: #{generator_forward.1} parent=0 // pred_check
    _
  $region27: #{generator_forward.1} parent=0 // pred_check_branch
    %2225 = sbr.rel (0) target = $region29
  $region28: #{generator_forward.1} parent=0 // pred_region
    _
  $region29: #{generator_forward.1} parent=0 // pred_fallthru
    _

</llo_original>
